<compile_context>
chip_gen: v5e
topology: v5e:2x2
jax: 0.10.0
libtpu: 0.0.40
codegen_flags: <defaults>
</compile_context>

<pallas_src>
import functools

import jax
import jax.numpy as jnp
from jax.experimental import pallas as pl
from jax.experimental.pallas import tpu as pltpu

# Standard KNRM Gaussian kernel parameters (exact-match kernel + 10 soft bins).
KERNEL_MUS = [1.0, 0.9, 0.7, 0.5, 0.3, 0.1, -0.1, -0.3, -0.5, -0.7, -0.9]
KERNEL_SIGMAS = [0.001] + [0.1] * 10
NUM_K = len(KERNEL_MUS)

_MASK_PENALTY = 1e6                 # masked doc cosine -> ~-1e6 => every kernel exp == 0
_VMEM_BUDGET = 20 * 1024 * 1024     # per-step estimate cap (v7x/v5e safe)
_VMEM_LIMIT = 32 * 1024 * 1024      # raises v5e's 16 MiB scoped default; no-op on v6e/v7x


def _round_up(x, m):
    return ((x + m - 1) // m) * m


def _l2_normalize(x, eps=1e-13):
    return x * jax.lax.rsqrt(jnp.sum(x * x, axis=-1, keepdims=True) + eps)


def _vmem_bytes_estimate(b_tile, ql_pad, dl_tile, d_pad, itemsize):
    """Rough per-step VMEM need: double-buffered inputs + acc + match/kde temps."""
    q_blk = b_tile * ql_pad * d_pad * itemsize
    d_blk = b_tile * dl_tile * d_pad * itemsize
    side = b_tile * dl_tile * 4 + b_tile * ql_pad * 4 + b_tile * 4
    acc = NUM_K * b_tile * ql_pad * 4
    tmp = 4 * b_tile * ql_pad * dl_tile * 4
    return 2 * (q_blk + d_blk + side) + acc + tmp


def knrm_kernel(q_ref, d_ref, qw_ref, dinv_ref, w_ref, b_ref, out_ref, acc_ref,
                *, soft_dtype):
    """One (batch-tile, doc-length-tile) grid step of KNRM scoring.

    q_ref   : [Bt, QLp, Dp]    bf16/f32  L2-normalized query emb; column D == 1.0
    d_ref   : [Bt, DLt, Dp]    bf16/f32  RAW doc emb; column D == -1e6*(1-doc_mask)
    qw_ref  : [Bt, QLp]        f32       idf * query padding mask
    dinv_ref: [Bt, DLt]        f32       1/||doc emb||  (1.0 at DL padding)
    w_ref   : [NUM_K]          f32 SMEM  final dense weights
    b_ref   : [1]              f32 SMEM  final dense bias
    out_ref : [Bt, 1]          f32       scores (written at the last DL tile)
    acc_ref : [NUM_K, Bt, QLp] f32 VMEM  per-kernel doc-sum accumulator
    """
    dl = pl.program_id(1)

    @pl.when(dl == 0)
    def _init():
        acc_ref[...] = jnp.zeros_like(acc_ref)

    # Contraction over D (lane axis of both blocks): bf16 MXU, f32 accumulate.
    # The spare D column carries the doc padding penalty, so masked / DL-padded
    # positions come out at ~-1e6 and every Gaussian kernel underflows to 0.
    raw = jnp.einsum('bqd,bkd->bqk', q_ref[...], d_ref[...],
                     preferred_element_type=jnp.float32)            # [Bt, QLp, DLt]
    # Post-matmul cosine normalization of the doc side (query is already unit norm).
    match = raw * dinv_ref[...][:, None, :]                          # f32

    partials = []
    # Exact-match kernel (sigma=0.001) is precision critical -> keep f32.
    diff0 = match - KERNEL_MUS[0]
    kde0 = jnp.exp(diff0 * diff0 * (-0.5 / (KERNEL_SIGMAS[0] * KERNEL_SIGMAS[0])))
    partials.append(jnp.sum(kde0, axis=-1))                          # [Bt, QLp]

    # 10 soft kernels (sigma=0.1): bf16 on v6e/v7x (EUP/VALU 2x), f32 on v5e.
    match_s = match.astype(soft_dtype)
    for k in range(1, NUM_K):
        coeff = -0.5 / (KERNEL_SIGMAS[k] * KERNEL_SIGMAS[k])
        diff = match_s - KERNEL_MUS[k]
        kde = jnp.exp(diff * diff * coeff)
        partials.append(jnp.sum(kde.astype(jnp.float32), axis=-1))

    # Single batched accumulator update (2 VMEM ops instead of 22).
    acc_ref[...] = acc_ref[...] + jnp.stack(partials, axis=0)

    @pl.when(dl == pl.num_programs(1) - 1)
    def _finalize():
        qw = qw_ref[...]                                             # [Bt, QLp]
        log_pq = jnp.log(jnp.maximum(acc_ref[...], 1e-10)) * 0.01    # [NUM_K, Bt, QLp]
        feats = jnp.sum(log_pq * qw[None, :, :], axis=-1, keepdims=True)  # [NUM_K, Bt, 1]
        score = jnp.zeros((qw.shape[0], 1), jnp.float32)
        for k in range(NUM_K):
            score = score + feats[k] * w_ref[k]                      # SMEM scalar weight
        out_ref[...] = score + b_ref[0]


@functools.partial(jax.jit, static_argnames=("use_fp16", "b_tile", "dl_tile"))
def neural_ir_score(query_ids, doc_ids, emb_table, idf_table, dense_w, dense_b,
                    use_fp16=True, b_tile=16, dl_tile=2048):
    """== NeuralIR_Encoder_WithIdfs_PassThrough.forward (KNRM inner model).

    Embedding/idf gathers, query L2 norm, doc inverse-norm reduction and layout
    padding are fused glue in plain JAX (single bf16 materialization of the doc
    tensor); all scoring math runs inside the Pallas kernel.
    """
    compute_dtype = jnp.bfloat16 if use_fp16 else jnp.float32
    itemsize = jnp.dtype(compute_dtype).itemsize
    device_kind = jax.devices()[0].device_kind.lower()
    # bf16 VPU/EUP only on v6e/v7x; v5e keeps the kde math in f32.
    soft_dtype = jnp.bfloat16 if (use_fp16 and "v5" not in device_kind) else jnp.float32

    B, QL = query_ids.shape
    _, DL = doc_ids.shape
    D = emb_table.shape[1]

    # ---- tiling / layout ----------------------------------------------------
    d_pad = _round_up(D + 1, 128)         # +1 spare column carries the doc-mask penalty
    ql_pad = _round_up(QL, 8)             # sublane-dense only; never pad QL toward 128

    # Batch ("parallel") axis: >=2 blocks when B allows so both v7x TCs get work.
    b_al = _round_up(B, 8)
    bt = min(max(8, _round_up(b_tile, 8)), b_al)
    half = (b_al // 2) // 8 * 8
    if half >= 8:
        bt = min(bt, half)

    # Doc-length tiling: keep DL padding <128 per tile and fit the VMEM budget.
    dl_base = _round_up(DL, 128)
    dl_cap = min(_round_up(max(dl_tile, 128), 128), dl_base)
    while True:
        n_dl = -(-dl_base // dl_cap)
        dl_t = _round_up(-(-dl_base // n_dl), 128)
        if _vmem_bytes_estimate(bt, ql_pad, dl_t, d_pad, itemsize) <= _VMEM_BUDGET:
            break
        if dl_t > 256:
            dl_cap = max(128, (dl_t // 2) // 128 * 128)
        elif bt > 8:
            bt = max(8, (bt // 2) // 8 * 8)
        else:
            break
    dl_tl = dl_t
    dl_pad = dl_tl * n_dl
    b_pad = _round_up(B, bt)
    n_b = b_pad // bt

    # ---- glue: gathers, query L2 norm, doc inverse norms, padding ------------
    q_norm = _l2_normalize(jnp.take(emb_table, query_ids, axis=0).astype(jnp.float32))
    q_mask = (query_ids > 0).astype(jnp.float32)
    q_idf = jnp.take(idf_table, query_ids, axis=0)[..., 0]
    q_weight = jnp.pad(q_idf * q_mask, ((0, b_pad - B), (0, ql_pad - QL)))   # [Bp, QLp]

    d_raw = jnp.take(emb_table, doc_ids, axis=0).astype(jnp.float32)         # [B, DL, D]
    d_inv = jax.lax.rsqrt(jnp.sum(d_raw * d_raw, axis=-1) + 1e-13)           # [B, DL]
    d_mask = (doc_ids > 0).astype(jnp.float32)

    # Query block [Bp, QLp, Dp]: spare column D holds 1.0 (penalty carrier).
    q_parts = [jnp.pad(q_norm.astype(compute_dtype),
                       ((0, b_pad - B), (0, ql_pad - QL), (0, 0))),
               jnp.ones((b_pad, ql_pad, 1), compute_dtype)]
    if d_pad > D + 1:
        q_parts.append(jnp.zeros((b_pad, ql_pad, d_pad - D - 1), compute_dtype))
    q_aug = jnp.concatenate(q_parts, axis=-1)

    # Doc block [Bp, DLp, Dp]: RAW embeddings (normalized post-matmul in-kernel);
    # spare column D holds -1e6*(1 - doc_mask) incl. the DL padding region.
    d_mask_p = jnp.pad(d_mask, ((0, b_pad - B), (0, dl_pad - DL)))           # pads -> 0
    pen_col = (_MASK_PENALTY * (d_mask_p - 1.0))[..., None]                  # [Bp, DLp, 1]
    d_parts = [jnp.pad(d_raw.astype(compute_dtype),
                       ((0, b_pad - B), (0, dl_pad - DL), (0, 0))),
               pen_col.astype(compute_dtype)]
    if d_pad > D + 1:
        d_parts.append(jnp.zeros((b_pad, dl_pad, d_pad - D - 1), compute_dtype))
    d_aug = jnp.concatenate(d_parts, axis=-1)                                # one bf16 pass

    d_inv_p = jnp.pad(d_inv, ((0, b_pad - B), (0, dl_pad - DL)), constant_values=1.0)

    w_flat = dense_w.reshape(-1).astype(jnp.float32)                         # [NUM_K]
    b_flat = dense_b.reshape(-1).astype(jnp.float32)                         # [1]

    kernel = functools.partial(knrm_kernel, soft_dtype=soft_dtype)
    out = pl.pallas_call(
        kernel,
        out_shape=jax.ShapeDtypeStruct((b_pad, 1), jnp.float32),
        grid_spec=pltpu.PrefetchScalarGridSpec(
            num_scalar_prefetch=0,
            grid=(n_b, n_dl),
            in_specs=[
                pl.BlockSpec((bt, ql_pad, d_pad), lambda b, t: (b, 0, 0)),
                pl.BlockSpec((bt, dl_tl, d_pad), lambda b, t: (b, t, 0)),
                pl.BlockSpec((bt, ql_pad), lambda b, t: (b, 0)),
                pl.BlockSpec((bt, dl_tl), lambda b, t: (b, t)),
                pl.BlockSpec(memory_space=pltpu.MemorySpace.SMEM),
                pl.BlockSpec(memory_space=pltpu.MemorySpace.SMEM),
            ],
            out_specs=pl.BlockSpec((bt, 1), lambda b, t: (b, 0)),
            scratch_shapes=[pltpu.VMEM((NUM_K, bt, ql_pad), jnp.float32)],
        ),
        compiler_params=pltpu.CompilerParams(
            dimension_semantics=("parallel", "arbitrary"),
            vmem_limit_bytes=_VMEM_LIMIT),
    )(q_aug, d_aug, q_weight, d_inv_p, w_flat, b_flat)

    return out[:B, 0]                                                        # [B] scores


def _knrm_reference(query_ids, doc_ids, emb_table, idf_table, dense_w, dense_b,
                    use_fp16=True):
    """Pure-JAX reference (same cosine formulation / matmul precision)."""
    cd = jnp.bfloat16 if use_fp16 else jnp.float32
    q = _l2_normalize(jnp.take(emb_table, query_ids, axis=0).astype(jnp.float32))
    d_raw = jnp.take(emb_table, doc_ids, axis=0).astype(jnp.float32)
    d_inv = jax.lax.rsqrt(jnp.sum(d_raw * d_raw, axis=-1) + 1e-13)
    q_mask = (query_ids > 0).astype(jnp.float32)
    d_mask = (doc_ids > 0).astype(jnp.float32)
    q_idf = jnp.take(idf_table, query_ids, axis=0)[..., 0]
    match = jnp.einsum('bqd,bkd->bqk', q.astype(cd), d_raw.astype(cd),
                       preferred_element_type=jnp.float32) * d_inv[:, None, :]
    feats = []
    for k in range(NUM_K):
        kde = jnp.exp(-((match - KERNEL_MUS[k]) ** 2) / (2.0 * KERNEL_SIGMAS[k] ** 2))
        kde = kde * d_mask[:, None, :]
        pq = jnp.log(jnp.maximum(jnp.sum(kde, axis=-1), 1e-10)) * 0.01
        feats.append(jnp.sum(pq * q_idf * q_mask, axis=-1))
    feats = jnp.stack(feats, axis=-1)                                        # [B, NUM_K]
    return feats @ dense_w.reshape(-1) + dense_b.reshape(())


if __name__ == "__main__":
    key = jax.random.PRNGKey(0)
    k1, k2, k3, k4, k5 = jax.random.split(key, 5)

    vocab, dim = 64, 32
    B, QL, DL = 2, 8, 16

    # Deterministic synthetic "embedders" (word_embeddings + word_idfs).
    emb_table = jax.random.normal(k1, (vocab, dim), jnp.float32) * 0.1
    emb_table = emb_table.at[0].set(0.0)                      # padding idx 0
    idf_table = jax.random.uniform(k2, (vocab, 1), jnp.float32, 1.0, 8.0)
    idf_table = idf_table.at[0].set(0.0)

    # Inner KNRM model parameters (final dense layer).
    dense_w = jax.random.normal(k3, (1, NUM_K), jnp.float32) * 0.1
    dense_b = jnp.zeros((1, 1), jnp.float32)

    # Query / document token ids (0 = padding).
    query_ids = jax.random.randint(k4, (B, QL), 1, vocab)
    doc_ids = jax.random.randint(k5, (B, DL), 1, vocab)
    query_ids = query_ids.at[:, -2:].set(0)
    doc_ids = doc_ids.at[:, -3:].set(0)

    scores = neural_ir_score(query_ids, doc_ids, emb_table, idf_table,
                             dense_w, dense_b, use_fp16=True)
    jax.block_until_ready(scores)
    assert scores.shape == (B,)

    ref = _knrm_reference(query_ids, doc_ids, emb_table, idf_table,
                          dense_w, dense_b, use_fp16=True)
    assert jnp.allclose(scores, ref, rtol=5e-2, atol=5e-2), (scores, ref)

    print("KERNEL_OK")
</pallas_src>

<mosaic_0001>
module attributes {stable_mosaic.version = 11 : i64} {
  func.func @knrm_kernel(%arg0: i32, %arg1: i32, %arg2: memref<8x8x128xbf16, #tpu.memory_space<vmem>>, %arg3: memref<8x128x128xbf16, #tpu.memory_space<vmem>>, %arg4: memref<8x8xf32, #tpu.memory_space<vmem>>, %arg5: memref<8x128xf32, #tpu.memory_space<vmem>>, %arg6: memref<11xf32, #tpu.memory_space<smem>>, %arg7: memref<1xf32, #tpu.memory_space<smem>>, %arg8: memref<8x1xf32, #tpu.memory_space<vmem>>, %arg9: memref<11x8x8xf32, #tpu.memory_space<vmem>>) attributes {dimension_semantics = [#tpu.dimension_semantics<parallel>, #tpu.dimension_semantics<arbitrary>], iteration_bounds = array<i64: 1, 1>, scalar_prefetch = 0 : i64, scratch_operands = 1 : i64, tpu.core_type = #tpu.core_type<tc>, window_params = [{transform_indices = @transform_0, window_bounds = array<i64: 8, 8, 128>}, {transform_indices = @transform_1, window_bounds = array<i64: 8, 128, 128>}, {transform_indices = @transform_2, window_bounds = array<i64: 8, 8>}, {transform_indices = @transform_3, window_bounds = array<i64: 8, 128>}, {transform_indices = @transform_4, window_bounds = array<i64: 11>}, {transform_indices = @transform_5, window_bounds = array<i64: 1>}, {transform_indices = @transform_6, window_bounds = array<i64: 8, 1>}]} {
    %c0_i32 = arith.constant 0 : i32
    %0 = arith.cmpi eq, %arg1, %c0_i32 : i32
    %1 = arith.extui %0 : i1 to i32
    %c0_i32_0 = arith.constant 0 : i32
    %2 = arith.cmpi ne, %1, %c0_i32_0 : i32
    scf.if %2 {
      %cst_49 = arith.constant 0.000000e+00 : f32
      %116 = vector.broadcast %cst_49 : f32 to vector<11x8x8xf32>
      %c0_50 = arith.constant 0 : index
      %c0_51 = arith.constant 0 : index
      %c0_52 = arith.constant 0 : index
      %117 = vector.load %arg9[%c0_50, %c0_51, %c0_52] : memref<11x8x8xf32, #tpu.memory_space<vmem>>, vector<11x8x8xf32>
      tpu.vector_store %arg9[%c0_50, %c0_51, %c0_52], %116 {strides = array<i32>} : memref<11x8x8xf32, #tpu.memory_space<vmem>>, vector<11x8x8xf32>,
    } else {
    }
    %c0 = arith.constant 0 : index
    %c0_1 = arith.constant 0 : index
    %c0_2 = arith.constant 0 : index
    %3 = vector.load %arg2[%c0, %c0_1, %c0_2] : memref<8x8x128xbf16, #tpu.memory_space<vmem>>, vector<8x8x128xbf16>
    %c0_3 = arith.constant 0 : index
    %c0_4 = arith.constant 0 : index
    %c0_5 = arith.constant 0 : index
    %4 = vector.load %arg3[%c0_3, %c0_4, %c0_5] : memref<8x128x128xbf16, #tpu.memory_space<vmem>>, vector<8x128x128xbf16>
    "tpu.trace_start"() <{level = 10 : i32, message = "bqd,bkd->bqk"}> : () -> ()
    %cst = arith.constant dense<0.000000e+00> : vector<8x8x128xf32>
    %5 = tpu.matmul %3, %4, %cst {dimension_numbers = #tpu.dot_dimension_numbers<[2], [2], [1], [1], [0, 0, 0, 1, 1, 1], [0], [0]>} : vector<8x8x128xbf16>, vector<8x128x128xbf16>, vector<8x8x128xf32> -> vector<8x8x128xf32>
    "tpu.trace_stop"() : () -> ()
    %c0_6 = arith.constant 0 : index
    %c0_7 = arith.constant 0 : index
    %6 = vector.load %arg5[%c0_6, %c0_7] : memref<8x128xf32, #tpu.memory_space<vmem>>, vector<8x128xf32>
    %7 = vector.shape_cast %6 : vector<8x128xf32> to vector<8x1x128xf32>
    %8 = vector.broadcast %7 : vector<8x1x128xf32> to vector<8x8x128xf32>
    %9 = arith.mulf %5, %8 : vector<8x8x128xf32>
    %cst_8 = arith.constant 1.000000e+00 : f32
    %10 = vector.broadcast %cst_8 : f32 to vector<8x8x128xf32>
    %11 = arith.subf %9, %10 : vector<8x8x128xf32>
    %12 = arith.mulf %11, %11 : vector<8x8x128xf32>
    %cst_9 = arith.constant -5.000000e+05 : f32
    %13 = vector.broadcast %cst_9 : f32 to vector<8x8x128xf32>
    %14 = arith.mulf %12, %13 : vector<8x8x128xf32>
    %15 = math.exp %14 : vector<8x8x128xf32>
    %cst_10 = arith.constant dense<0.000000e+00> : vector<8x8xf32>
    %16 = vector.multi_reduction <add>, %15, %cst_10 [2] : vector<8x8x128xf32> to vector<8x8xf32>
    %17 = arith.truncf %9 : vector<8x8x128xf32> to vector<8x8x128xbf16>
    %cst_11 = arith.constant 8.984370e-01 : bf16
    %18 = vector.broadcast %cst_11 : bf16 to vector<8x8x128xbf16>
    %19 = arith.subf %17, %18 : vector<8x8x128xbf16>
    %20 = arith.mulf %19, %19 : vector<8x8x128xbf16>
    %cst_12 = arith.constant -5.000000e+01 : bf16
    %21 = vector.broadcast %cst_12 : bf16 to vector<8x8x128xbf16>
    %22 = arith.mulf %20, %21 : vector<8x8x128xbf16>
    %23 = math.exp %22 : vector<8x8x128xbf16>
    %24 = arith.extf %23 : vector<8x8x128xbf16> to vector<8x8x128xf32>
    %cst_13 = arith.constant dense<0.000000e+00> : vector<8x8xf32>
    %25 = vector.multi_reduction <add>, %24, %cst_13 [2] : vector<8x8x128xf32> to vector<8x8xf32>
    %cst_14 = arith.constant 6.992180e-01 : bf16
    %26 = vector.broadcast %cst_14 : bf16 to vector<8x8x128xbf16>
    %27 = arith.subf %17, %26 : vector<8x8x128xbf16>
    %28 = arith.mulf %27, %27 : vector<8x8x128xbf16>
    %cst_15 = arith.constant -5.000000e+01 : bf16
    %29 = vector.broadcast %cst_15 : bf16 to vector<8x8x128xbf16>
    %30 = arith.mulf %28, %29 : vector<8x8x128xbf16>
    %31 = math.exp %30 : vector<8x8x128xbf16>
    %32 = arith.extf %31 : vector<8x8x128xbf16> to vector<8x8x128xf32>
    %cst_16 = arith.constant dense<0.000000e+00> : vector<8x8xf32>
    %33 = vector.multi_reduction <add>, %32, %cst_16 [2] : vector<8x8x128xf32> to vector<8x8xf32>
    %cst_17 = arith.constant 5.000000e-01 : bf16
    %34 = vector.broadcast %cst_17 : bf16 to vector<8x8x128xbf16>
    %35 = arith.subf %17, %34 : vector<8x8x128xbf16>
    %36 = arith.mulf %35, %35 : vector<8x8x128xbf16>
    %cst_18 = arith.constant -5.000000e+01 : bf16
    %37 = vector.broadcast %cst_18 : bf16 to vector<8x8x128xbf16>
    %38 = arith.mulf %36, %37 : vector<8x8x128xbf16>
    %39 = math.exp %38 : vector<8x8x128xbf16>
    %40 = arith.extf %39 : vector<8x8x128xbf16> to vector<8x8x128xf32>
    %cst_19 = arith.constant dense<0.000000e+00> : vector<8x8xf32>
    %41 = vector.multi_reduction <add>, %40, %cst_19 [2] : vector<8x8x128xf32> to vector<8x8xf32>
    %cst_20 = arith.constant 3.007810e-01 : bf16
    %42 = vector.broadcast %cst_20 : bf16 to vector<8x8x128xbf16>
    %43 = arith.subf %17, %42 : vector<8x8x128xbf16>
    %44 = arith.mulf %43, %43 : vector<8x8x128xbf16>
    %cst_21 = arith.constant -5.000000e+01 : bf16
    %45 = vector.broadcast %cst_21 : bf16 to vector<8x8x128xbf16>
    %46 = arith.mulf %44, %45 : vector<8x8x128xbf16>
    %47 = math.exp %46 : vector<8x8x128xbf16>
    %48 = arith.extf %47 : vector<8x8x128xbf16> to vector<8x8x128xf32>
    %cst_22 = arith.constant dense<0.000000e+00> : vector<8x8xf32>
    %49 = vector.multi_reduction <add>, %48, %cst_22 [2] : vector<8x8x128xf32> to vector<8x8xf32>
    %cst_23 = arith.constant 1.000980e-01 : bf16
    %50 = vector.broadcast %cst_23 : bf16 to vector<8x8x128xbf16>
    %51 = arith.subf %17, %50 : vector<8x8x128xbf16>
    %52 = arith.mulf %51, %51 : vector<8x8x128xbf16>
    %cst_24 = arith.constant -5.000000e+01 : bf16
    %53 = vector.broadcast %cst_24 : bf16 to vector<8x8x128xbf16>
    %54 = arith.mulf %52, %53 : vector<8x8x128xbf16>
    %55 = math.exp %54 : vector<8x8x128xbf16>
    %56 = arith.extf %55 : vector<8x8x128xbf16> to vector<8x8x128xf32>
    %cst_25 = arith.constant dense<0.000000e+00> : vector<8x8xf32>
    %57 = vector.multi_reduction <add>, %56, %cst_25 [2] : vector<8x8x128xf32> to vector<8x8xf32>
    %cst_26 = arith.constant -1.000980e-01 : bf16
    %58 = vector.broadcast %cst_26 : bf16 to vector<8x8x128xbf16>
    %59 = arith.subf %17, %58 : vector<8x8x128xbf16>
    %60 = arith.mulf %59, %59 : vector<8x8x128xbf16>
    %cst_27 = arith.constant -5.000000e+01 : bf16
    %61 = vector.broadcast %cst_27 : bf16 to vector<8x8x128xbf16>
    %62 = arith.mulf %60, %61 : vector<8x8x128xbf16>
    %63 = math.exp %62 : vector<8x8x128xbf16>
    %64 = arith.extf %63 : vector<8x8x128xbf16> to vector<8x8x128xf32>
    %cst_28 = arith.constant dense<0.000000e+00> : vector<8x8xf32>
    %65 = vector.multi_reduction <add>, %64, %cst_28 [2] : vector<8x8x128xf32> to vector<8x8xf32>
    %cst_29 = arith.constant -3.007810e-01 : bf16
    %66 = vector.broadcast %cst_29 : bf16 to vector<8x8x128xbf16>
    %67 = arith.subf %17, %66 : vector<8x8x128xbf16>
    %68 = arith.mulf %67, %67 : vector<8x8x128xbf16>
    %cst_30 = arith.constant -5.000000e+01 : bf16
    %69 = vector.broadcast %cst_30 : bf16 to vector<8x8x128xbf16>
    %70 = arith.mulf %68, %69 : vector<8x8x128xbf16>
    %71 = math.exp %70 : vector<8x8x128xbf16>
    %72 = arith.extf %71 : vector<8x8x128xbf16> to vector<8x8x128xf32>
    %cst_31 = arith.constant dense<0.000000e+00> : vector<8x8xf32>
    %73 = vector.multi_reduction <add>, %72, %cst_31 [2] : vector<8x8x128xf32> to vector<8x8xf32>
    %cst_32 = arith.constant -5.000000e-01 : bf16
    %74 = vector.broadcast %cst_32 : bf16 to vector<8x8x128xbf16>
    %75 = arith.subf %17, %74 : vector<8x8x128xbf16>
    %76 = arith.mulf %75, %75 : vector<8x8x128xbf16>
    %cst_33 = arith.constant -5.000000e+01 : bf16
    %77 = vector.broadcast %cst_33 : bf16 to vector<8x8x128xbf16>
    %78 = arith.mulf %76, %77 : vector<8x8x128xbf16>
    %79 = math.exp %78 : vector<8x8x128xbf16>
    %80 = arith.extf %79 : vector<8x8x128xbf16> to vector<8x8x128xf32>
    %cst_34 = arith.constant dense<0.000000e+00> : vector<8x8xf32>
    %81 = vector.multi_reduction <add>, %80, %cst_34 [2] : vector<8x8x128xf32> to vector<8x8xf32>
    %cst_35 = arith.constant -6.992180e-01 : bf16
    %82 = vector.broadcast %cst_35 : bf16 to vector<8x8x128xbf16>
    %83 = arith.subf %17, %82 : vector<8x8x128xbf16>
    %84 = arith.mulf %83, %83 : vector<8x8x128xbf16>
    %cst_36 = arith.constant -5.000000e+01 : bf16
    %85 = vector.broadcast %cst_36 : bf16 to vector<8x8x128xbf16>
    %86 = arith.mulf %84, %85 : vector<8x8x128xbf16>
    %87 = math.exp %86 : vector<8x8x128xbf16>
    %88 = arith.extf %87 : vector<8x8x128xbf16> to vector<8x8x128xf32>
    %cst_37 = arith.constant dense<0.000000e+00> : vector<8x8xf32>
    %89 = vector.multi_reduction <add>, %88, %cst_37 [2] : vector<8x8x128xf32> to vector<8x8xf32>
    %cst_38 = arith.constant -8.984370e-01 : bf16
    %90 = vector.broadcast %cst_38 : bf16 to vector<8x8x128xbf16>
    %91 = arith.subf %17, %90 : vector<8x8x128xbf16>
    %92 = arith.mulf %91, %91 : vector<8x8x128xbf16>
    %cst_39 = arith.constant -5.000000e+01 : bf16
    %93 = vector.broadcast %cst_39 : bf16 to vector<8x8x128xbf16>
    %94 = arith.mulf %92, %93 : vector<8x8x128xbf16>
    %95 = math.exp %94 : vector<8x8x128xbf16>
    %96 = arith.extf %95 : vector<8x8x128xbf16> to vector<8x8x128xf32>
    %cst_40 = arith.constant dense<0.000000e+00> : vector<8x8xf32>
    %97 = vector.multi_reduction <add>, %96, %cst_40 [2] : vector<8x8x128xf32> to vector<8x8xf32>
    %c0_41 = arith.constant 0 : index
    %c0_42 = arith.constant 0 : index
    %c0_43 = arith.constant 0 : index
    %98 = vector.load %arg9[%c0_41, %c0_42, %c0_43] : memref<11x8x8xf32, #tpu.memory_space<vmem>>, vector<11x8x8xf32>
    %99 = vector.shape_cast %16 : vector<8x8xf32> to vector<1x8x8xf32>
    %100 = vector.shape_cast %25 : vector<8x8xf32> to vector<1x8x8xf32>
    %101 = vector.shape_cast %33 : vector<8x8xf32> to vector<1x8x8xf32>
    %102 = vector.shape_cast %41 : vector<8x8xf32> to vector<1x8x8xf32>
    %103 = vector.shape_cast %49 : vector<8x8xf32> to vector<1x8x8xf32>
    %104 = vector.shape_cast %57 : vector<8x8xf32> to vector<1x8x8xf32>
    %105 = vector.shape_cast %65 : vector<8x8xf32> to vector<1x8x8xf32>
    %106 = vector.shape_cast %73 : vector<8x8xf32> to vector<1x8x8xf32>
    %107 = vector.shape_cast %81 : vector<8x8xf32> to vector<1x8x8xf32>
    %108 = vector.shape_cast %89 : vector<8x8xf32> to vector<1x8x8xf32>
    %109 = vector.shape_cast %97 : vector<8x8xf32> to vector<1x8x8xf32>
    %110 = tpu.concatenate %99, %100, %101, %102, %103, %104, %105, %106, %107, %108, %109 in 0 : vector<1x8x8xf32>, vector<1x8x8xf32>, vector<1x8x8xf32>, vector<1x8x8xf32>, vector<1x8x8xf32>, vector<1x8x8xf32>, vector<1x8x8xf32>, vector<1x8x8xf32>, vector<1x8x8xf32>, vector<1x8x8xf32>, vector<1x8x8xf32> -> vector<11x8x8xf32>
    %111 = arith.addf %98, %110 : vector<11x8x8xf32>
    %c0_44 = arith.constant 0 : index
    %c0_45 = arith.constant 0 : index
    %c0_46 = arith.constant 0 : index
    %112 = vector.load %arg9[%c0_44, %c0_45, %c0_46] : memref<11x8x8xf32, #tpu.memory_space<vmem>>, vector<11x8x8xf32>
    tpu.vector_store %arg9[%c0_44, %c0_45, %c0_46], %111 {strides = array<i32>} : memref<11x8x8xf32, #tpu.memory_space<vmem>>, vector<11x8x8xf32>,
    %c0_i32_47 = arith.constant 0 : i32
    %113 = arith.cmpi eq, %arg1, %c0_i32_47 : i32
    %114 = arith.extui %113 : i1 to i32
    %c0_i32_48 = arith.constant 0 : i32
    %115 = arith.cmpi ne, %114, %c0_i32_48 : i32
    scf.if %115 {
      %c0_49 = arith.constant 0 : index
      %c0_50 = arith.constant 0 : index
      %116 = vector.load %arg4[%c0_49, %c0_50] : memref<8x8xf32, #tpu.memory_space<vmem>>, vector<8x8xf32>
      %c0_51 = arith.constant 0 : index
      %c0_52 = arith.constant 0 : index
      %c0_53 = arith.constant 0 : index
      %117 = vector.load %arg9[%c0_51, %c0_52, %c0_53] : memref<11x8x8xf32, #tpu.memory_space<vmem>>, vector<11x8x8xf32>
      %cst_54 = arith.constant 1.000000e-10 : f32
      %118 = vector.broadcast %cst_54 : f32 to vector<11x8x8xf32>
      %119 = arith.maximumf %117, %118 : vector<11x8x8xf32>
      %120 = math.log %119 : vector<11x8x8xf32>
      %cst_55 = arith.constant 0.00999999977 : f32
      %121 = vector.broadcast %cst_55 : f32 to vector<11x8x8xf32>
      %122 = arith.mulf %120, %121 : vector<11x8x8xf32>
      %123 = vector.shape_cast %116 : vector<8x8xf32> to vector<1x8x8xf32>
      %124 = vector.broadcast %123 : vector<1x8x8xf32> to vector<11x8x8xf32>
      %125 = arith.mulf %122, %124 : vector<11x8x8xf32>
      %cst_56 = arith.constant dense<0.000000e+00> : vector<11x8xf32>
      %126 = vector.multi_reduction <add>, %125, %cst_56 [2] : vector<11x8x8xf32> to vector<11x8xf32>
      %127 = vector.shape_cast %126 : vector<11x8xf32> to vector<11x8x1xf32>
      %cst_57 = arith.constant 0.000000e+00 : f32
      %128 = vector.broadcast %cst_57 : f32 to vector<8x1xf32>
      %129 = vector.extract_strided_slice %127 {offsets = [0, 0, 0], sizes = [1, 8, 1], strides = [1, 1, 1]} : vector<11x8x1xf32> to vector<1x8x1xf32>
      %130 = vector.shape_cast %129 : vector<1x8x1xf32> to vector<8x1xf32>
      %c0_58 = arith.constant 0 : index
      %131 = memref.load %arg6[%c0_58] : memref<11xf32, #tpu.memory_space<smem>>
      %132 = vector.broadcast %131 : f32 to vector<8x1xf32>
      %133 = arith.mulf %130, %132 : vector<8x1xf32>
      %134 = arith.addf %128, %133 : vector<8x1xf32>
      %135 = vector.extract_strided_slice %127 {offsets = [1, 0, 0], sizes = [1, 8, 1], strides = [1, 1, 1]} : vector<11x8x1xf32> to vector<1x8x1xf32>
      %136 = vector.shape_cast %135 : vector<1x8x1xf32> to vector<8x1xf32>
      %c1 = arith.constant 1 : index
      %137 = memref.load %arg6[%c1] : memref<11xf32, #tpu.memory_space<smem>>
      %138 = vector.broadcast %137 : f32 to vector<8x1xf32>
      %139 = arith.mulf %136, %138 : vector<8x1xf32>
      %140 = arith.addf %134, %139 : vector<8x1xf32>
      %141 = vector.extract_strided_slice %127 {offsets = [2, 0, 0], sizes = [1, 8, 1], strides = [1, 1, 1]} : vector<11x8x1xf32> to vector<1x8x1xf32>
      %142 = vector.shape_cast %141 : vector<1x8x1xf32> to vector<8x1xf32>
      %c2 = arith.constant 2 : index
      %143 = memref.load %arg6[%c2] : memref<11xf32, #tpu.memory_space<smem>>
      %144 = vector.broadcast %143 : f32 to vector<8x1xf32>
      %145 = arith.mulf %142, %144 : vector<8x1xf32>
      %146 = arith.addf %140, %145 : vector<8x1xf32>
      %147 = vector.extract_strided_slice %127 {offsets = [3, 0, 0], sizes = [1, 8, 1], strides = [1, 1, 1]} : vector<11x8x1xf32> to vector<1x8x1xf32>
      %148 = vector.shape_cast %147 : vector<1x8x1xf32> to vector<8x1xf32>
      %c3 = arith.constant 3 : index
      %149 = memref.load %arg6[%c3] : memref<11xf32, #tpu.memory_space<smem>>
      %150 = vector.broadcast %149 : f32 to vector<8x1xf32>
      %151 = arith.mulf %148, %150 : vector<8x1xf32>
      %152 = arith.addf %146, %151 : vector<8x1xf32>
      %153 = vector.extract_strided_slice %127 {offsets = [4, 0, 0], sizes = [1, 8, 1], strides = [1, 1, 1]} : vector<11x8x1xf32> to vector<1x8x1xf32>
      %154 = vector.shape_cast %153 : vector<1x8x1xf32> to vector<8x1xf32>
      %c4 = arith.constant 4 : index
      %155 = memref.load %arg6[%c4] : memref<11xf32, #tpu.memory_space<smem>>
      %156 = vector.broadcast %155 : f32 to vector<8x1xf32>
      %157 = arith.mulf %154, %156 : vector<8x1xf32>
      %158 = arith.addf %152, %157 : vector<8x1xf32>
      %159 = vector.extract_strided_slice %127 {offsets = [5, 0, 0], sizes = [1, 8, 1], strides = [1, 1, 1]} : vector<11x8x1xf32> to vector<1x8x1xf32>
      %160 = vector.shape_cast %159 : vector<1x8x1xf32> to vector<8x1xf32>
      %c5 = arith.constant 5 : index
      %161 = memref.load %arg6[%c5] : memref<11xf32, #tpu.memory_space<smem>>
      %162 = vector.broadcast %161 : f32 to vector<8x1xf32>
      %163 = arith.mulf %160, %162 : vector<8x1xf32>
      %164 = arith.addf %158, %163 : vector<8x1xf32>
      %165 = vector.extract_strided_slice %127 {offsets = [6, 0, 0], sizes = [1, 8, 1], strides = [1, 1, 1]} : vector<11x8x1xf32> to vector<1x8x1xf32>
      %166 = vector.shape_cast %165 : vector<1x8x1xf32> to vector<8x1xf32>
      %c6 = arith.constant 6 : index
      %167 = memref.load %arg6[%c6] : memref<11xf32, #tpu.memory_space<smem>>
      %168 = vector.broadcast %167 : f32 to vector<8x1xf32>
      %169 = arith.mulf %166, %168 : vector<8x1xf32>
      %170 = arith.addf %164, %169 : vector<8x1xf32>
      %171 = vector.extract_strided_slice %127 {offsets = [7, 0, 0], sizes = [1, 8, 1], strides = [1, 1, 1]} : vector<11x8x1xf32> to vector<1x8x1xf32>
      %172 = vector.shape_cast %171 : vector<1x8x1xf32> to vector<8x1xf32>
      %c7 = arith.constant 7 : index
      %173 = memref.load %arg6[%c7] : memref<11xf32, #tpu.memory_space<smem>>
      %174 = vector.broadcast %173 : f32 to vector<8x1xf32>
      %175 = arith.mulf %172, %174 : vector<8x1xf32>
      %176 = arith.addf %170, %175 : vector<8x1xf32>
      %177 = vector.extract_strided_slice %127 {offsets = [8, 0, 0], sizes = [1, 8, 1], strides = [1, 1, 1]} : vector<11x8x1xf32> to vector<1x8x1xf32>
      %178 = vector.shape_cast %177 : vector<1x8x1xf32> to vector<8x1xf32>
      %c8 = arith.constant 8 : index
      %179 = memref.load %arg6[%c8] : memref<11xf32, #tpu.memory_space<smem>>
      %180 = vector.broadcast %179 : f32 to vector<8x1xf32>
      %181 = arith.mulf %178, %180 : vector<8x1xf32>
      %182 = arith.addf %176, %181 : vector<8x1xf32>
      %183 = vector.extract_strided_slice %127 {offsets = [9, 0, 0], sizes = [1, 8, 1], strides = [1, 1, 1]} : vector<11x8x1xf32> to vector<1x8x1xf32>
      %184 = vector.shape_cast %183 : vector<1x8x1xf32> to vector<8x1xf32>
      %c9 = arith.constant 9 : index
      %185 = memref.load %arg6[%c9] : memref<11xf32, #tpu.memory_space<smem>>
      %186 = vector.broadcast %185 : f32 to vector<8x1xf32>
      %187 = arith.mulf %184, %186 : vector<8x1xf32>
      %188 = arith.addf %182, %187 : vector<8x1xf32>
      %189 = vector.extract_strided_slice %127 {offsets = [10, 0, 0], sizes = [1, 8, 1], strides = [1, 1, 1]} : vector<11x8x1xf32> to vector<1x8x1xf32>
      %190 = vector.shape_cast %189 : vector<1x8x1xf32> to vector<8x1xf32>
      %c10 = arith.constant 10 : index
      %191 = memref.load %arg6[%c10] : memref<11xf32, #tpu.memory_space<smem>>
      %192 = vector.broadcast %191 : f32 to vector<8x1xf32>
      %193 = arith.mulf %190, %192 : vector<8x1xf32>
      %194 = arith.addf %188, %193 : vector<8x1xf32>
      %c0_59 = arith.constant 0 : index
      %195 = memref.load %arg7[%c0_59] : memref<1xf32, #tpu.memory_space<smem>>
      %196 = vector.broadcast %195 : f32 to vector<8x1xf32>
      %197 = arith.addf %194, %196 : vector<8x1xf32>
      %c0_60 = arith.constant 0 : index
      %c0_61 = arith.constant 0 : index
      %198 = vector.load %arg8[%c0_60, %c0_61] : memref<8x1xf32, #tpu.memory_space<vmem>>, vector<8x1xf32>
      tpu.vector_store %arg8[%c0_60, %c0_61], %197 {strides = array<i32>} : memref<8x1xf32, #tpu.memory_space<vmem>>, vector<8x1xf32>,
    } else {
    }
    return
  }
  func.func @transform_0(%arg0: i32, %arg1: i32) -> (i32, i32, i32) {
    %c0_i32 = arith.constant 0 : i32
    %c0_i32_0 = arith.constant 0 : i32
    %c0_i32_1 = arith.constant 0 : i32
    return %arg0, %c0_i32, %c0_i32_0 : i32, i32, i32
  }
  func.func @transform_1(%arg0: i32, %arg1: i32) -> (i32, i32, i32) {
    %c0_i32 = arith.constant 0 : i32
    %c0_i32_0 = arith.constant 0 : i32
    return %arg0, %arg1, %c0_i32 : i32, i32, i32
  }
  func.func @transform_2(%arg0: i32, %arg1: i32) -> (i32, i32) {
    %c0_i32 = arith.constant 0 : i32
    %c0_i32_0 = arith.constant 0 : i32
    return %arg0, %c0_i32 : i32, i32
  }
  func.func @transform_3(%arg0: i32, %arg1: i32) -> (i32, i32) {
    %c0_i32 = arith.constant 0 : i32
    return %arg0, %arg1 : i32, i32
  }
  func.func @transform_4(%arg0: i32, %arg1: i32) -> i32 {
    %c0_i32 = arith.constant 0 : i32
    %c0_i32_0 = arith.constant 0 : i32
    return %c0_i32 : i32
  }
  func.func @transform_5(%arg0: i32, %arg1: i32) -> i32 {
    %c0_i32 = arith.constant 0 : i32
    %c0_i32_0 = arith.constant 0 : i32
    return %c0_i32 : i32
  }
  func.func @transform_6(%arg0: i32, %arg1: i32) -> (i32, i32) {
    %c0_i32 = arith.constant 0 : i32
    %c0_i32_0 = arith.constant 0 : i32
    return %arg0, %c0_i32 : i32, i32
  }
}

</mosaic_0001>

<llo_original>
// kernel: neural_ir_score.1
$region0: #{neural_ir_score.1}
  #allocation0 [shape = 'u32[]', space=smem, size = 0x4, offset = 0x4, fixed_abs, tag = 'smem constant byte address 0x4 - core index']
  #allocation1 [shape = 'u32[72,128]{1,0:T(1,128)}', space=vmem, size = 0x9000, scoped, tag = 'internal scratch']
  #allocation2 [shape = 'f32[11,8,8]{2,1,0:T(8,128)}', space=vmem, size = 0xb000, scoped, tag = 'scratch operand']
  #allocation3 [shape = 'f32[1]{0:T(128)S(6)}', space=smem, size = 0x200, scoped, tag = 'scoped memory for neural_ir_score.1']
  %s0 = inlined_call_operand.vmem [shape: bf16[8,8,128], index: 0, kind: input, shape index: {}]
  %s1 = inlined_call_operand.vmem [shape: bf16[8,128,128], index: 1, kind: input, shape index: {}]
  %s2 = inlined_call_operand.vmem [shape: f32[8,8], index: 2, kind: input, shape index: {}]
  %s3 = inlined_call_operand.vmem [shape: f32[8,128], index: 3, kind: input, shape index: {}]
  %s4 = inlined_call_operand.vmem [shape: f32[11], index: 4, kind: input, shape index: {}]
  %s5 = inlined_call_operand.<no memory space> [shape: f32[1], index: 5, kind: input, shape index: {}]
  %s6 = inlined_call_operand.vmem [shape: f32[8,1], index: 6, kind: output, shape index: {}]
  %s7 = sld [smem:[#allocation0]]
  $region46: #{neural_ir_score.1} parent=0
    _
  %s9 = ssub.s32 1, %s7
  %s10 = scalar_select 0, %s9, %s7
  %11 = sst [smem:[#allocation3]] %s5
  $region1: #{neural_ir_score.1} parent=0
    #allocation4 [shape = 'u8[512]{0}', space=smem, size = 0x200, scoped, tag = 'input window, operand 4, single buffered']
    #allocation5 [shape = 's32[1]{0}', space=sflag, size = 0x4, scoped, tag = 'scoped memory for neural_ir_score.1']
    %12 = vsyncpa [#allocation5], 0
    // Predicated region
    $region2: #{neural_ir_score.1} parent=1 // pred_check
      _
    $region3: #{neural_ir_score.1} parent=1 // pred_check_branch
      %14 = sbr.rel (0) target = $region5
    $region4: #{neural_ir_score.1} parent=1 // pred_region
      _
    $region5: #{neural_ir_score.1} parent=1 // pred_fallthru
      _
    // Predicated region
    $region6: #{neural_ir_score.1} parent=1 // pred_check
      _
    $region7: #{neural_ir_score.1} parent=1 // pred_check_branch
      %16 = sbr.rel (0) target = $region9
    $region8: #{neural_ir_score.1} parent=1 // pred_region
      _
    $region9: #{neural_ir_score.1} parent=1 // pred_fallthru
      _
    // Predicated region
    $region10: #{neural_ir_score.1} parent=1 // pred_check
      _
    $region11: #{neural_ir_score.1} parent=1 // pred_check_branch
      %18 = sbr.rel (0) target = $region13
    $region12: #{neural_ir_score.1} parent=1 // pred_region
      _
    $region13: #{neural_ir_score.1} parent=1 // pred_fallthru
      _
    // Predicated region
    $region14: #{neural_ir_score.1} parent=1 // pred_check
      _
    $region15: #{neural_ir_score.1} parent=1 // pred_check_branch
      %20 = sbr.rel (0) target = $region17
    $region16: #{neural_ir_score.1} parent=1 // pred_region
      _
    $region17: #{neural_ir_score.1} parent=1 // pred_fallthru
      _
    // Predicated region
    $region18: #{neural_ir_score.1} parent=1 // pred_check
      _
    $region19: #{neural_ir_score.1} parent=1 // pred_check_branch
      %22 = sbr.rel (0) target = $region21
    $region20: #{neural_ir_score.1} parent=1 // pred_region
      %24 = vsyncadd [#allocation5], 0
      %s26 = sshll.u32 %s4, 4
      %s27 = int_to_ptr.vmem [resolvable:$true] %s26
      %29 = dma.vmem_to_smem %s27, 16, [#allocation4], [#allocation5]
    $region21: #{neural_ir_score.1} parent=1 // pred_fallthru
      _
    // Predicated region
    $region22: #{neural_ir_score.1} parent=1 // pred_check
      _
    $region23: #{neural_ir_score.1} parent=1 // pred_check_branch
      %31 = sbr.rel (0) target = $region25
    $region24: #{neural_ir_score.1} parent=1 // pred_region
      _
    $region25: #{neural_ir_score.1} parent=1 // pred_fallthru
      _
    // Predicated region
    $region26: #{neural_ir_score.1} parent=1 // pred_check
      _
    $region27: #{neural_ir_score.1} parent=1 // pred_check_branch
      %33 = sbr.rel (0) target = $region29
    $region28: #{neural_ir_score.1} parent=1 // pred_region
      %35 = dma.done [#allocation5], 16
    $region29: #{neural_ir_score.1} parent=1 // pred_fallthru
      _
    %36 = sfence
    %p37 = scmp.eq.s32.totalorder 0, 0
    // Predicated region
    $region30: #{neural_ir_score.1} parent=1 // pred_check
      %p38 = pneg %p37
    $region31: #{neural_ir_score.1} parent=1 // pred_check_branch
      %40 = sbr.rel (%p38) target = $region33
    $region32: #{neural_ir_score.1} parent=1 // pred_region
      %vm41 = vcmask 64512
      %42 = vst.msk [vmem:[#allocation2] sm:$0xff] %vm41, 0.0
      %43 = vst.msk [vmem:[#allocation2 + $0x8] sm:$0xff] %vm41, 0.0
      %44 = vst.msk [vmem:[#allocation2 + $0x10] sm:$0xff] %vm41, 0.0
      %45 = vst.msk [vmem:[#allocation2 + $0x18] sm:$0xff] %vm41, 0.0
      %46 = vst.msk [vmem:[#allocation2 + $0x20] sm:$0xff] %vm41, 0.0
      %47 = vst.msk [vmem:[#allocation2 + $0x28] sm:$0xff] %vm41, 0.0
      %48 = vst.msk [vmem:[#allocation2 + $0x30] sm:$0xff] %vm41, 0.0
      %49 = vst.msk [vmem:[#allocation2 + $0x38] sm:$0xff] %vm41, 0.0
      %50 = vst.msk [vmem:[#allocation2 + $0x40] sm:$0xff] %vm41, 0.0
      %51 = vst.msk [vmem:[#allocation2 + $0x48] sm:$0xff] %vm41, 0.0
      %52 = vst.msk [vmem:[#allocation2 + $0x50] sm:$0xff] %vm41, 0.0
    $region33: #{neural_ir_score.1} parent=1 // pred_fallthru
      _
    %v53 = vld [vmem:[%s0] sm:$0xf]
    %v54 = vld [vmem:[%s0 + $0x4] sm:$0xf]
    %v55 = vld [vmem:[%s0 + $0x8] sm:$0xf]
    %v56 = vld [vmem:[%s0 + $0xc] sm:$0xf]
    %v57 = vld [vmem:[%s0 + $0x10] sm:$0xf]
    %v58 = vld [vmem:[%s0 + $0x14] sm:$0xf]
    %v59 = vld [vmem:[%s0 + $0x18] sm:$0xf]
    %v60 = vld [vmem:[%s0 + $0x1c] sm:$0xf]
    %v61 = vld [vmem:[%s1] sm:$0xf]
    %v62 = vld [vmem:[%s1 + $0x4] sm:$0xf]
    %v63 = vld [vmem:[%s1 + $0x8] sm:$0xf]
    %v64 = vld [vmem:[%s1 + $0xc] sm:$0xf]
    %v65 = vld [vmem:[%s1 + $0x10] sm:$0xf]
    %v66 = vld [vmem:[%s1 + $0x14] sm:$0xf]
    %v67 = vld [vmem:[%s1 + $0x18] sm:$0xf]
    %v68 = vld [vmem:[%s1 + $0x1c] sm:$0xf]
    %v69 = vld [vmem:[%s1 + $0x20] sm:$0xf]
    %v70 = vld [vmem:[%s1 + $0x24] sm:$0xf]
    %v71 = vld [vmem:[%s1 + $0x28] sm:$0xf]
    %v72 = vld [vmem:[%s1 + $0x2c] sm:$0xf]
    %v73 = vld [vmem:[%s1 + $0x30] sm:$0xf]
    %v74 = vld [vmem:[%s1 + $0x34] sm:$0xf]
    %v75 = vld [vmem:[%s1 + $0x38] sm:$0xf]
    %v76 = vld [vmem:[%s1 + $0x3c] sm:$0xf]
    %v77 = vld [vmem:[%s1 + $0x40] sm:$0xf]
    %v78 = vld [vmem:[%s1 + $0x44] sm:$0xf]
    %v79 = vld [vmem:[%s1 + $0x48] sm:$0xf]
    %v80 = vld [vmem:[%s1 + $0x4c] sm:$0xf]
    %v81 = vld [vmem:[%s1 + $0x50] sm:$0xf]
    %v82 = vld [vmem:[%s1 + $0x54] sm:$0xf]
    %v83 = vld [vmem:[%s1 + $0x58] sm:$0xf]
    %v84 = vld [vmem:[%s1 + $0x5c] sm:$0xf]
    %v85 = vld [vmem:[%s1 + $0x60] sm:$0xf]
    %v86 = vld [vmem:[%s1 + $0x64] sm:$0xf]
    %v87 = vld [vmem:[%s1 + $0x68] sm:$0xf]
    %v88 = vld [vmem:[%s1 + $0x6c] sm:$0xf]
    %v89 = vld [vmem:[%s1 + $0x70] sm:$0xf]
    %v90 = vld [vmem:[%s1 + $0x74] sm:$0xf]
    %v91 = vld [vmem:[%s1 + $0x78] sm:$0xf]
    %v92 = vld [vmem:[%s1 + $0x7c] sm:$0xf]
    %v93 = vld [vmem:[%s1 + $0x80] sm:$0xf]
    %v94 = vld [vmem:[%s1 + $0x84] sm:$0xf]
    %v95 = vld [vmem:[%s1 + $0x88] sm:$0xf]
    %v96 = vld [vmem:[%s1 + $0x8c] sm:$0xf]
    %v97 = vld [vmem:[%s1 + $0x90] sm:$0xf]
    %v98 = vld [vmem:[%s1 + $0x94] sm:$0xf]
    %v99 = vld [vmem:[%s1 + $0x98] sm:$0xf]
    %v100 = vld [vmem:[%s1 + $0x9c] sm:$0xf]
    %v101 = vld [vmem:[%s1 + $0xa0] sm:$0xf]
    %v102 = vld [vmem:[%s1 + $0xa4] sm:$0xf]
    %v103 = vld [vmem:[%s1 + $0xa8] sm:$0xf]
    %v104 = vld [vmem:[%s1 + $0xac] sm:$0xf]
    %v105 = vld [vmem:[%s1 + $0xb0] sm:$0xf]
    %v106 = vld [vmem:[%s1 + $0xb4] sm:$0xf]
    %v107 = vld [vmem:[%s1 + $0xb8] sm:$0xf]
    %v108 = vld [vmem:[%s1 + $0xbc] sm:$0xf]
    %v109 = vld [vmem:[%s1 + $0xc0] sm:$0xf]
    %v110 = vld [vmem:[%s1 + $0xc4] sm:$0xf]
    %v111 = vld [vmem:[%s1 + $0xc8] sm:$0xf]
    %v112 = vld [vmem:[%s1 + $0xcc] sm:$0xf]
    %v113 = vld [vmem:[%s1 + $0xd0] sm:$0xf]
    %v114 = vld [vmem:[%s1 + $0xd4] sm:$0xf]
    %v115 = vld [vmem:[%s1 + $0xd8] sm:$0xf]
    %v116 = vld [vmem:[%s1 + $0xdc] sm:$0xf]
    %v117 = vld [vmem:[%s1 + $0xe0] sm:$0xf]
    %v118 = vld [vmem:[%s1 + $0xe4] sm:$0xf]
    %v119 = vld [vmem:[%s1 + $0xe8] sm:$0xf]
    %v120 = vld [vmem:[%s1 + $0xec] sm:$0xf]
    %v121 = vld [vmem:[%s1 + $0xf0] sm:$0xf]
    %v122 = vld [vmem:[%s1 + $0xf4] sm:$0xf]
    %v123 = vld [vmem:[%s1 + $0xf8] sm:$0xf]
    %v124 = vld [vmem:[%s1 + $0xfc] sm:$0xf]
    %v125 = vld [vmem:[%s1 + $0x100] sm:$0xf]
    %v126 = vld [vmem:[%s1 + $0x104] sm:$0xf]
    %v127 = vld [vmem:[%s1 + $0x108] sm:$0xf]
    %v128 = vld [vmem:[%s1 + $0x10c] sm:$0xf]
    %v129 = vld [vmem:[%s1 + $0x110] sm:$0xf]
    %v130 = vld [vmem:[%s1 + $0x114] sm:$0xf]
    %v131 = vld [vmem:[%s1 + $0x118] sm:$0xf]
    %v132 = vld [vmem:[%s1 + $0x11c] sm:$0xf]
    %v133 = vld [vmem:[%s1 + $0x120] sm:$0xf]
    %v134 = vld [vmem:[%s1 + $0x124] sm:$0xf]
    %v135 = vld [vmem:[%s1 + $0x128] sm:$0xf]
    %v136 = vld [vmem:[%s1 + $0x12c] sm:$0xf]
    %v137 = vld [vmem:[%s1 + $0x130] sm:$0xf]
    %v138 = vld [vmem:[%s1 + $0x134] sm:$0xf]
    %v139 = vld [vmem:[%s1 + $0x138] sm:$0xf]
    %v140 = vld [vmem:[%s1 + $0x13c] sm:$0xf]
    %v141 = vld [vmem:[%s1 + $0x140] sm:$0xf]
    %v142 = vld [vmem:[%s1 + $0x144] sm:$0xf]
    %v143 = vld [vmem:[%s1 + $0x148] sm:$0xf]
    %v144 = vld [vmem:[%s1 + $0x14c] sm:$0xf]
    %v145 = vld [vmem:[%s1 + $0x150] sm:$0xf]
    %v146 = vld [vmem:[%s1 + $0x154] sm:$0xf]
    %v147 = vld [vmem:[%s1 + $0x158] sm:$0xf]
    %v148 = vld [vmem:[%s1 + $0x15c] sm:$0xf]
    %v149 = vld [vmem:[%s1 + $0x160] sm:$0xf]
    %v150 = vld [vmem:[%s1 + $0x164] sm:$0xf]
    %v151 = vld [vmem:[%s1 + $0x168] sm:$0xf]
    %v152 = vld [vmem:[%s1 + $0x16c] sm:$0xf]
    %v153 = vld [vmem:[%s1 + $0x170] sm:$0xf]
    %v154 = vld [vmem:[%s1 + $0x174] sm:$0xf]
    %v155 = vld [vmem:[%s1 + $0x178] sm:$0xf]
    %v156 = vld [vmem:[%s1 + $0x17c] sm:$0xf]
    %v157 = vld [vmem:[%s1 + $0x180] sm:$0xf]
    %v158 = vld [vmem:[%s1 + $0x184] sm:$0xf]
    %v159 = vld [vmem:[%s1 + $0x188] sm:$0xf]
    %v160 = vld [vmem:[%s1 + $0x18c] sm:$0xf]
    %v161 = vld [vmem:[%s1 + $0x190] sm:$0xf]
    %v162 = vld [vmem:[%s1 + $0x194] sm:$0xf]
    %v163 = vld [vmem:[%s1 + $0x198] sm:$0xf]
    %v164 = vld [vmem:[%s1 + $0x19c] sm:$0xf]
    %v165 = vld [vmem:[%s1 + $0x1a0] sm:$0xf]
    %v166 = vld [vmem:[%s1 + $0x1a4] sm:$0xf]
    %v167 = vld [vmem:[%s1 + $0x1a8] sm:$0xf]
    %v168 = vld [vmem:[%s1 + $0x1ac] sm:$0xf]
    %v169 = vld [vmem:[%s1 + $0x1b0] sm:$0xf]
    %v170 = vld [vmem:[%s1 + $0x1b4] sm:$0xf]
    %v171 = vld [vmem:[%s1 + $0x1b8] sm:$0xf]
    %v172 = vld [vmem:[%s1 + $0x1bc] sm:$0xf]
    %v173 = vld [vmem:[%s1 + $0x1c0] sm:$0xf]
    %v174 = vld [vmem:[%s1 + $0x1c4] sm:$0xf]
    %v175 = vld [vmem:[%s1 + $0x1c8] sm:$0xf]
    %v176 = vld [vmem:[%s1 + $0x1cc] sm:$0xf]
    %v177 = vld [vmem:[%s1 + $0x1d0] sm:$0xf]
    %v178 = vld [vmem:[%s1 + $0x1d4] sm:$0xf]
    %v179 = vld [vmem:[%s1 + $0x1d8] sm:$0xf]
    %v180 = vld [vmem:[%s1 + $0x1dc] sm:$0xf]
    %v181 = vld [vmem:[%s1 + $0x1e0] sm:$0xf]
    %v182 = vld [vmem:[%s1 + $0x1e4] sm:$0xf]
    %v183 = vld [vmem:[%s1 + $0x1e8] sm:$0xf]
    %v184 = vld [vmem:[%s1 + $0x1ec] sm:$0xf]
    %v185 = vld [vmem:[%s1 + $0x1f0] sm:$0xf]
    %v186 = vld [vmem:[%s1 + $0x1f4] sm:$0xf]
    %v187 = vld [vmem:[%s1 + $0x1f8] sm:$0xf]
    %v188 = vld [vmem:[%s1 + $0x1fc] sm:$0xf]
    %v205 = vunpack.c.l.b16 %v61
    %v206 = vunpack.c.l.b16 %v62
    %v207 = vunpack.c.l.b16 %v63
    %v208 = vunpack.c.l.b16 %v64
    %v209 = vunpack.c.l.b16 %v65
    %v210 = vunpack.c.l.b16 %v66
    %v211 = vunpack.c.l.b16 %v67
    %v212 = vunpack.c.l.b16 %v68
    %v213 = vunpack.c.l.b16 %v69
    %v214 = vunpack.c.l.b16 %v70
    %v215 = vunpack.c.l.b16 %v71
    %v216 = vunpack.c.l.b16 %v72
    %v217 = vunpack.c.l.b16 %v73
    %v218 = vunpack.c.l.b16 %v74
    %v219 = vunpack.c.l.b16 %v75
    %v220 = vunpack.c.l.b16 %v76
    %v221 = vpack.c.b16 %v206, %v205
    %v222 = vpack.c.b16 %v208, %v207
    %v223 = vpack.c.b16 %v210, %v209
    %v224 = vpack.c.b16 %v212, %v211
    %v225 = vpack.c.b16 %v214, %v213
    %v226 = vpack.c.b16 %v216, %v215
    %v227 = vpack.c.b16 %v218, %v217
    %v228 = vpack.c.b16 %v220, %v219
    %237 = vmatpush.bf16.xpose.msra.mxu0 %v228
    %238 = vmatpush.bf16.xpose.msra.mxu0 %v227
    %239 = vmatpush.bf16.xpose.msra.mxu0 %v226
    %240 = vmatpush.bf16.xpose.msra.mxu0 %v225
    %241 = vmatpush.bf16.xpose.msra.mxu0 %v224
    %242 = vmatpush.bf16.xpose.msra.mxu0 %v223
    %243 = vmatpush.bf16.xpose.msra.mxu0 %v222
    %244 = vmatpush.bf16.xpose.msra.mxu0 %v221
    %245 = vmatmul.bf16.gmra.mxu0 %v53
    %v246 = vpop.f32.mrf.mxu0
    %v247 = vadd.f32 0.0, %v246
    %v248 = vpop.f32.mrf.mxu0
    %249 = vdwg.mxu0
    %v266 = vunpack.c.l.b16 %v77
    %v267 = vunpack.c.l.b16 %v78
    %v268 = vunpack.c.l.b16 %v79
    %v269 = vunpack.c.l.b16 %v80
    %v270 = vunpack.c.l.b16 %v81
    %v271 = vunpack.c.l.b16 %v82
    %v272 = vunpack.c.l.b16 %v83
    %v273 = vunpack.c.l.b16 %v84
    %v274 = vunpack.c.l.b16 %v85
    %v275 = vunpack.c.l.b16 %v86
    %v276 = vunpack.c.l.b16 %v87
    %v277 = vunpack.c.l.b16 %v88
    %v278 = vunpack.c.l.b16 %v89
    %v279 = vunpack.c.l.b16 %v90
    %v280 = vunpack.c.l.b16 %v91
    %v281 = vunpack.c.l.b16 %v92
    %v282 = vpack.c.b16 %v267, %v266
    %v283 = vpack.c.b16 %v269, %v268
    %v284 = vpack.c.b16 %v271, %v270
    %v285 = vpack.c.b16 %v273, %v272
    %v286 = vpack.c.b16 %v275, %v274
    %v287 = vpack.c.b16 %v277, %v276
    %v288 = vpack.c.b16 %v279, %v278
    %v289 = vpack.c.b16 %v281, %v280
    %298 = vmatpush.bf16.xpose.msra.mxu0 %v289
    %299 = vmatpush.bf16.xpose.msra.mxu0 %v288
    %300 = vmatpush.bf16.xpose.msra.mxu0 %v287
    %301 = vmatpush.bf16.xpose.msra.mxu0 %v286
    %302 = vmatpush.bf16.xpose.msra.mxu0 %v285
    %303 = vmatpush.bf16.xpose.msra.mxu0 %v284
    %304 = vmatpush.bf16.xpose.msra.mxu0 %v283
    %305 = vmatpush.bf16.xpose.msra.mxu0 %v282
    %306 = vmatmul.bf16.gmra.mxu0 %v54
    %v307 = vpop.f32.mrf.mxu0
    %v308 = vadd.f32 0.0, %v307
    %v309 = vpop.f32.mrf.mxu0
    %310 = vdwg.mxu0
    %v327 = vunpack.c.l.b16 %v93
    %v328 = vunpack.c.l.b16 %v94
    %v329 = vunpack.c.l.b16 %v95
    %v330 = vunpack.c.l.b16 %v96
    %v331 = vunpack.c.l.b16 %v97
    %v332 = vunpack.c.l.b16 %v98
    %v333 = vunpack.c.l.b16 %v99
    %v334 = vunpack.c.l.b16 %v100
    %v335 = vunpack.c.l.b16 %v101
    %v336 = vunpack.c.l.b16 %v102
    %v337 = vunpack.c.l.b16 %v103
    %v338 = vunpack.c.l.b16 %v104
    %v339 = vunpack.c.l.b16 %v105
    %v340 = vunpack.c.l.b16 %v106
    %v341 = vunpack.c.l.b16 %v107
    %v342 = vunpack.c.l.b16 %v108
    %v343 = vpack.c.b16 %v328, %v327
    %v344 = vpack.c.b16 %v330, %v329
    %v345 = vpack.c.b16 %v332, %v331
    %v346 = vpack.c.b16 %v334, %v333
    %v347 = vpack.c.b16 %v336, %v335
    %v348 = vpack.c.b16 %v338, %v337
    %v349 = vpack.c.b16 %v340, %v339
    %v350 = vpack.c.b16 %v342, %v341
    %359 = vmatpush.bf16.xpose.msra.mxu0 %v350
    %360 = vmatpush.bf16.xpose.msra.mxu0 %v349
    %361 = vmatpush.bf16.xpose.msra.mxu0 %v348
    %362 = vmatpush.bf16.xpose.msra.mxu0 %v347
    %363 = vmatpush.bf16.xpose.msra.mxu0 %v346
    %364 = vmatpush.bf16.xpose.msra.mxu0 %v345
    %365 = vmatpush.bf16.xpose.msra.mxu0 %v344
    %366 = vmatpush.bf16.xpose.msra.mxu0 %v343
    %367 = vmatmul.bf16.gmra.mxu0 %v55
    %v368 = vpop.f32.mrf.mxu0
    %v369 = vadd.f32 0.0, %v368
    %v370 = vpop.f32.mrf.mxu0
    %371 = vdwg.mxu0
    %v388 = vunpack.c.l.b16 %v109
    %v389 = vunpack.c.l.b16 %v110
    %v390 = vunpack.c.l.b16 %v111
    %v391 = vunpack.c.l.b16 %v112
    %v392 = vunpack.c.l.b16 %v113
    %v393 = vunpack.c.l.b16 %v114
    %v394 = vunpack.c.l.b16 %v115
    %v395 = vunpack.c.l.b16 %v116
    %v396 = vunpack.c.l.b16 %v117
    %v397 = vunpack.c.l.b16 %v118
    %v398 = vunpack.c.l.b16 %v119
    %v399 = vunpack.c.l.b16 %v120
    %v400 = vunpack.c.l.b16 %v121
    %v401 = vunpack.c.l.b16 %v122
    %v402 = vunpack.c.l.b16 %v123
    %v403 = vunpack.c.l.b16 %v124
    %v404 = vpack.c.b16 %v389, %v388
    %v405 = vpack.c.b16 %v391, %v390
    %v406 = vpack.c.b16 %v393, %v392
    %v407 = vpack.c.b16 %v395, %v394
    %v408 = vpack.c.b16 %v397, %v396
    %v409 = vpack.c.b16 %v399, %v398
    %v410 = vpack.c.b16 %v401, %v400
    %v411 = vpack.c.b16 %v403, %v402
    %420 = vmatpush.bf16.xpose.msra.mxu0 %v411
    %421 = vmatpush.bf16.xpose.msra.mxu0 %v410
    %422 = vmatpush.bf16.xpose.msra.mxu0 %v409
    %423 = vmatpush.bf16.xpose.msra.mxu0 %v408
    %424 = vmatpush.bf16.xpose.msra.mxu0 %v407
    %425 = vmatpush.bf16.xpose.msra.mxu0 %v406
    %426 = vmatpush.bf16.xpose.msra.mxu0 %v405
    %427 = vmatpush.bf16.xpose.msra.mxu0 %v404
    %428 = vmatmul.bf16.gmra.mxu0 %v56
    %v429 = vpop.f32.mrf.mxu0
    %v430 = vadd.f32 0.0, %v429
    %v431 = vpop.f32.mrf.mxu0
    %432 = vdwg.mxu0
    %v449 = vunpack.c.l.b16 %v125
    %v450 = vunpack.c.l.b16 %v126
    %v451 = vunpack.c.l.b16 %v127
    %v452 = vunpack.c.l.b16 %v128
    %v453 = vunpack.c.l.b16 %v129
    %v454 = vunpack.c.l.b16 %v130
    %v455 = vunpack.c.l.b16 %v131
    %v456 = vunpack.c.l.b16 %v132
    %v457 = vunpack.c.l.b16 %v133
    %v458 = vunpack.c.l.b16 %v134
    %v459 = vunpack.c.l.b16 %v135
    %v460 = vunpack.c.l.b16 %v136
    %v461 = vunpack.c.l.b16 %v137
    %v462 = vunpack.c.l.b16 %v138
    %v463 = vunpack.c.l.b16 %v139
    %v464 = vunpack.c.l.b16 %v140
    %v465 = vpack.c.b16 %v450, %v449
    %v466 = vpack.c.b16 %v452, %v451
    %v467 = vpack.c.b16 %v454, %v453
    %v468 = vpack.c.b16 %v456, %v455
    %v469 = vpack.c.b16 %v458, %v457
    %v470 = vpack.c.b16 %v460, %v459
    %v471 = vpack.c.b16 %v462, %v461
    %v472 = vpack.c.b16 %v464, %v463
    %481 = vmatpush.bf16.xpose.msra.mxu0 %v472
    %482 = vmatpush.bf16.xpose.msra.mxu0 %v471
    %483 = vmatpush.bf16.xpose.msra.mxu0 %v470
    %484 = vmatpush.bf16.xpose.msra.mxu0 %v469
    %485 = vmatpush.bf16.xpose.msra.mxu0 %v468
    %486 = vmatpush.bf16.xpose.msra.mxu0 %v467
    %487 = vmatpush.bf16.xpose.msra.mxu0 %v466
    %488 = vmatpush.bf16.xpose.msra.mxu0 %v465
    %489 = vmatmul.bf16.gmra.mxu0 %v57
    %v490 = vpop.f32.mrf.mxu0
    %v491 = vadd.f32 0.0, %v490
    %v492 = vpop.f32.mrf.mxu0
    %493 = vdwg.mxu0
    %v510 = vunpack.c.l.b16 %v141
    %v511 = vunpack.c.l.b16 %v142
    %v512 = vunpack.c.l.b16 %v143
    %v513 = vunpack.c.l.b16 %v144
    %v514 = vunpack.c.l.b16 %v145
    %v515 = vunpack.c.l.b16 %v146
    %v516 = vunpack.c.l.b16 %v147
    %v517 = vunpack.c.l.b16 %v148
    %v518 = vunpack.c.l.b16 %v149
    %v519 = vunpack.c.l.b16 %v150
    %v520 = vunpack.c.l.b16 %v151
    %v521 = vunpack.c.l.b16 %v152
    %v522 = vunpack.c.l.b16 %v153
    %v523 = vunpack.c.l.b16 %v154
    %v524 = vunpack.c.l.b16 %v155
    %v525 = vunpack.c.l.b16 %v156
    %v526 = vpack.c.b16 %v511, %v510
    %v527 = vpack.c.b16 %v513, %v512
    %v528 = vpack.c.b16 %v515, %v514
    %v529 = vpack.c.b16 %v517, %v516
    %v530 = vpack.c.b16 %v519, %v518
    %v531 = vpack.c.b16 %v521, %v520
    %v532 = vpack.c.b16 %v523, %v522
    %v533 = vpack.c.b16 %v525, %v524
    %542 = vmatpush.bf16.xpose.msra.mxu0 %v533
    %543 = vmatpush.bf16.xpose.msra.mxu0 %v532
    %544 = vmatpush.bf16.xpose.msra.mxu0 %v531
    %545 = vmatpush.bf16.xpose.msra.mxu0 %v530
    %546 = vmatpush.bf16.xpose.msra.mxu0 %v529
    %547 = vmatpush.bf16.xpose.msra.mxu0 %v528
    %548 = vmatpush.bf16.xpose.msra.mxu0 %v527
    %549 = vmatpush.bf16.xpose.msra.mxu0 %v526
    %550 = vmatmul.bf16.gmra.mxu0 %v58
    %v551 = vpop.f32.mrf.mxu0
    %v552 = vadd.f32 0.0, %v551
    %v553 = vpop.f32.mrf.mxu0
    %554 = vdwg.mxu0
    %v571 = vunpack.c.l.b16 %v157
    %v572 = vunpack.c.l.b16 %v158
    %v573 = vunpack.c.l.b16 %v159
    %v574 = vunpack.c.l.b16 %v160
    %v575 = vunpack.c.l.b16 %v161
    %v576 = vunpack.c.l.b16 %v162
    %v577 = vunpack.c.l.b16 %v163
    %v578 = vunpack.c.l.b16 %v164
    %v579 = vunpack.c.l.b16 %v165
    %v580 = vunpack.c.l.b16 %v166
    %v581 = vunpack.c.l.b16 %v167
    %v582 = vunpack.c.l.b16 %v168
    %v583 = vunpack.c.l.b16 %v169
    %v584 = vunpack.c.l.b16 %v170
    %v585 = vunpack.c.l.b16 %v171
    %v586 = vunpack.c.l.b16 %v172
    %v587 = vpack.c.b16 %v572, %v571
    %v588 = vpack.c.b16 %v574, %v573
    %v589 = vpack.c.b16 %v576, %v575
    %v590 = vpack.c.b16 %v578, %v577
    %v591 = vpack.c.b16 %v580, %v579
    %v592 = vpack.c.b16 %v582, %v581
    %v593 = vpack.c.b16 %v584, %v583
    %v594 = vpack.c.b16 %v586, %v585
    %603 = vmatpush.bf16.xpose.msra.mxu0 %v594
    %604 = vmatpush.bf16.xpose.msra.mxu0 %v593
    %605 = vmatpush.bf16.xpose.msra.mxu0 %v592
    %606 = vmatpush.bf16.xpose.msra.mxu0 %v591
    %607 = vmatpush.bf16.xpose.msra.mxu0 %v590
    %608 = vmatpush.bf16.xpose.msra.mxu0 %v589
    %609 = vmatpush.bf16.xpose.msra.mxu0 %v588
    %610 = vmatpush.bf16.xpose.msra.mxu0 %v587
    %611 = vmatmul.bf16.gmra.mxu0 %v59
    %v612 = vpop.f32.mrf.mxu0
    %v613 = vadd.f32 0.0, %v612
    %v614 = vpop.f32.mrf.mxu0
    %615 = vdwg.mxu0
    %v632 = vunpack.c.l.b16 %v173
    %v633 = vunpack.c.l.b16 %v174
    %v634 = vunpack.c.l.b16 %v175
    %v635 = vunpack.c.l.b16 %v176
    %v636 = vunpack.c.l.b16 %v177
    %v637 = vunpack.c.l.b16 %v178
    %v638 = vunpack.c.l.b16 %v179
    %v639 = vunpack.c.l.b16 %v180
    %v640 = vunpack.c.l.b16 %v181
    %v641 = vunpack.c.l.b16 %v182
    %v642 = vunpack.c.l.b16 %v183
    %v643 = vunpack.c.l.b16 %v184
    %v644 = vunpack.c.l.b16 %v185
    %v645 = vunpack.c.l.b16 %v186
    %v646 = vunpack.c.l.b16 %v187
    %v647 = vunpack.c.l.b16 %v188
    %v648 = vpack.c.b16 %v633, %v632
    %v649 = vpack.c.b16 %v635, %v634
    %v650 = vpack.c.b16 %v637, %v636
    %v651 = vpack.c.b16 %v639, %v638
    %v652 = vpack.c.b16 %v641, %v640
    %v653 = vpack.c.b16 %v643, %v642
    %v654 = vpack.c.b16 %v645, %v644
    %v655 = vpack.c.b16 %v647, %v646
    %664 = vmatpush.bf16.xpose.msra.mxu0 %v655
    %665 = vmatpush.bf16.xpose.msra.mxu0 %v654
    %666 = vmatpush.bf16.xpose.msra.mxu0 %v653
    %667 = vmatpush.bf16.xpose.msra.mxu0 %v652
    %668 = vmatpush.bf16.xpose.msra.mxu0 %v651
    %669 = vmatpush.bf16.xpose.msra.mxu0 %v650
    %670 = vmatpush.bf16.xpose.msra.mxu0 %v649
    %671 = vmatpush.bf16.xpose.msra.mxu0 %v648
    %672 = vmatmul.bf16.gmra.mxu0 %v60
    %v673 = vpop.f32.mrf.mxu0
    %v674 = vadd.f32 0.0, %v673
    %v675 = vpop.f32.mrf.mxu0
    %676 = vdwg.mxu0
    %v677 = vld [vmem:[%s3] sm:$0xff]
    %v679 = vrot.slane %v677, 1
    %v680 = vrot.slane %v677, 2
    %v681 = vrot.slane %v677, 3
    %v682 = vrot.slane %v677, 4
    %v683 = vrot.slane %v677, 5
    %v684 = vrot.slane %v677, 6
    %v685 = vrot.slane %v677, 7
    %v686 = vperm.slane %v677, 0
    %v687 = vperm.slane %v679, 0
    %v688 = vperm.slane %v680, 0
    %v689 = vperm.slane %v681, 0
    %v690 = vperm.slane %v682, 0
    %v691 = vperm.slane %v683, 0
    %v692 = vperm.slane %v684, 0
    %v693 = vperm.slane %v685, 0
    %v702 = vmul.f32 %v247, %v686
    %v703 = vmul.f32 %v308, %v687
    %v704 = vmul.f32 %v369, %v688
    %v705 = vmul.f32 %v430, %v689
    %v706 = vmul.f32 %v491, %v690
    %v707 = vmul.f32 %v552, %v691
    %v708 = vmul.f32 %v613, %v692
    %v709 = vmul.f32 %v674, %v693
    %v710 = vsub.f32 %v702, 1.0
    %v711 = vsub.f32 %v703, 1.0
    %v712 = vsub.f32 %v704, 1.0
    %v713 = vsub.f32 %v705, 1.0
    %v714 = vsub.f32 %v706, 1.0
    %v715 = vsub.f32 %v707, 1.0
    %v716 = vsub.f32 %v708, 1.0
    %v717 = vsub.f32 %v709, 1.0
    %v718 = vmul.f32 %v710, %v710
    %v719 = vmul.f32 %v711, %v711
    %v720 = vmul.f32 %v712, %v712
    %v721 = vmul.f32 %v713, %v713
    %v722 = vmul.f32 %v714, %v714
    %v723 = vmul.f32 %v715, %v715
    %v724 = vmul.f32 %v716, %v716
    %v725 = vmul.f32 %v717, %v717
    %v726 = vmul.f32 %v718, -500000.0
    %v727 = vmul.f32 %v719, -500000.0
    %v728 = vmul.f32 %v720, -500000.0
    %v729 = vmul.f32 %v721, -500000.0
    %v730 = vmul.f32 %v722, -500000.0
    %v731 = vmul.f32 %v723, -500000.0
    %v732 = vmul.f32 %v724, -500000.0
    %v733 = vmul.f32 %v725, -500000.0
    %v734 = vmul.f32 %v726, 1.442695
    %v735 = vpow.pop %v734
    %v736 = vmul.f32 %v727, 1.442695
    %v737 = vpow.pop %v736
    %v738 = vmul.f32 %v728, 1.442695
    %v739 = vpow.pop %v738
    %v740 = vmul.f32 %v729, 1.442695
    %v741 = vpow.pop %v740
    %v742 = vmul.f32 %v730, 1.442695
    %v743 = vpow.pop %v742
    %v744 = vmul.f32 %v731, 1.442695
    %v745 = vpow.pop %v744
    %v746 = vmul.f32 %v732, 1.442695
    %v747 = vpow.pop %v746
    %v748 = vmul.f32 %v733, 1.442695
    %v749 = vpow.pop %v748
    %750 = vadd.xlane.f32.xlu0 %v735
    %v751 = vpop.xlane.xlu0 %750
    %752 = vadd.xlane.f32.xlu0 %v737
    %v753 = vpop.xlane.xlu0 %752
    %754 = vadd.xlane.f32.xlu0 %v739
    %v755 = vpop.xlane.xlu0 %754
    %756 = vadd.xlane.f32.xlu0 %v741
    %v757 = vpop.xlane.xlu0 %756
    %758 = vadd.xlane.f32.xlu0 %v743
    %v759 = vpop.xlane.xlu0 %758
    %760 = vadd.xlane.f32.xlu0 %v745
    %v761 = vpop.xlane.xlu0 %760
    %762 = vadd.xlane.f32.xlu0 %v747
    %v763 = vpop.xlane.xlu0 %762
    %764 = vadd.xlane.f32.xlu0 %v749
    %v765 = vpop.xlane.xlu0 %764
    %v766 = vpack.c.bf16 %v702, %v702
    %v767 = vpack.c.bf16 %v703, %v703
    %v768 = vpack.c.bf16 %v704, %v704
    %v769 = vpack.c.bf16 %v705, %v705
    %v770 = vpack.c.bf16 %v706, %v706
    %v771 = vpack.c.bf16 %v707, %v707
    %v772 = vpack.c.bf16 %v708, %v708
    %v773 = vpack.c.bf16 %v709, %v709
    %v774 = vunpack.c.l.bf16 %v766
    %v775 = vunpack.c.l.bf16 %v767
    %v776 = vunpack.c.l.bf16 %v768
    %v777 = vunpack.c.l.bf16 %v769
    %v778 = vunpack.c.l.bf16 %v770
    %v779 = vunpack.c.l.bf16 %v771
    %v780 = vunpack.c.l.bf16 %v772
    %v781 = vunpack.c.l.bf16 %v773
    %v782 = vsub.f32 %v774, 0.8984375
    %v783 = vsub.f32 %v775, 0.8984375
    %v784 = vsub.f32 %v776, 0.8984375
    %v785 = vsub.f32 %v777, 0.8984375
    %v786 = vsub.f32 %v778, 0.8984375
    %v787 = vsub.f32 %v779, 0.8984375
    %v788 = vsub.f32 %v780, 0.8984375
    %v789 = vsub.f32 %v781, 0.8984375
    %v790 = vpack.c.bf16 %v782, %v782
    %v791 = vpack.c.bf16 %v783, %v783
    %v792 = vpack.c.bf16 %v784, %v784
    %v793 = vpack.c.bf16 %v785, %v785
    %v794 = vpack.c.bf16 %v786, %v786
    %v795 = vpack.c.bf16 %v787, %v787
    %v796 = vpack.c.bf16 %v788, %v788
    %v797 = vpack.c.bf16 %v789, %v789
    %v798 = vunpack.c.l.bf16 %v790
    %v799 = vunpack.c.l.bf16 %v791
    %v800 = vunpack.c.l.bf16 %v792
    %v801 = vunpack.c.l.bf16 %v793
    %v802 = vunpack.c.l.bf16 %v794
    %v803 = vunpack.c.l.bf16 %v795
    %v804 = vunpack.c.l.bf16 %v796
    %v805 = vunpack.c.l.bf16 %v797
    %v806 = vmul.f32 %v798, %v798
    %v807 = vmul.f32 %v799, %v799
    %v808 = vmul.f32 %v800, %v800
    %v809 = vmul.f32 %v801, %v801
    %v810 = vmul.f32 %v802, %v802
    %v811 = vmul.f32 %v803, %v803
    %v812 = vmul.f32 %v804, %v804
    %v813 = vmul.f32 %v805, %v805
    %v814 = vpack.c.bf16 %v806, %v806
    %v815 = vpack.c.bf16 %v807, %v807
    %v816 = vpack.c.bf16 %v808, %v808
    %v817 = vpack.c.bf16 %v809, %v809
    %v818 = vpack.c.bf16 %v810, %v810
    %v819 = vpack.c.bf16 %v811, %v811
    %v820 = vpack.c.bf16 %v812, %v812
    %v821 = vpack.c.bf16 %v813, %v813
    %v822 = vunpack.c.l.bf16 %v814
    %v823 = vunpack.c.l.bf16 %v815
    %v824 = vunpack.c.l.bf16 %v816
    %v825 = vunpack.c.l.bf16 %v817
    %v826 = vunpack.c.l.bf16 %v818
    %v827 = vunpack.c.l.bf16 %v819
    %v828 = vunpack.c.l.bf16 %v820
    %v829 = vunpack.c.l.bf16 %v821
    %v830 = vmul.f32 %v822, -50.0
    %v831 = vmul.f32 %v823, -50.0
    %v832 = vmul.f32 %v824, -50.0
    %v833 = vmul.f32 %v825, -50.0
    %v834 = vmul.f32 %v826, -50.0
    %v835 = vmul.f32 %v827, -50.0
    %v836 = vmul.f32 %v828, -50.0
    %v837 = vmul.f32 %v829, -50.0
    %v838 = vpack.c.bf16 %v830, %v830
    %v839 = vpack.c.bf16 %v831, %v831
    %v840 = vpack.c.bf16 %v832, %v832
    %v841 = vpack.c.bf16 %v833, %v833
    %v842 = vpack.c.bf16 %v834, %v834
    %v843 = vpack.c.bf16 %v835, %v835
    %v844 = vpack.c.bf16 %v836, %v836
    %v845 = vpack.c.bf16 %v837, %v837
    %v846 = vunpack.c.l.bf16 %v838
    %v847 = vunpack.c.l.bf16 %v839
    %v848 = vunpack.c.l.bf16 %v840
    %v849 = vunpack.c.l.bf16 %v841
    %v850 = vunpack.c.l.bf16 %v842
    %v851 = vunpack.c.l.bf16 %v843
    %v852 = vunpack.c.l.bf16 %v844
    %v853 = vunpack.c.l.bf16 %v845
    %v854 = vmul.f32 %v846, 1.442695
    %v855 = vpow.pop %v854
    %v856 = vmul.f32 %v847, 1.442695
    %v857 = vpow.pop %v856
    %v858 = vmul.f32 %v848, 1.442695
    %v859 = vpow.pop %v858
    %v860 = vmul.f32 %v849, 1.442695
    %v861 = vpow.pop %v860
    %v862 = vmul.f32 %v850, 1.442695
    %v863 = vpow.pop %v862
    %v864 = vmul.f32 %v851, 1.442695
    %v865 = vpow.pop %v864
    %v866 = vmul.f32 %v852, 1.442695
    %v867 = vpow.pop %v866
    %v868 = vmul.f32 %v853, 1.442695
    %v869 = vpow.pop %v868
    %v870 = vpack.c.bf16 %v855, %v855
    %v871 = vpack.c.bf16 %v857, %v857
    %v872 = vpack.c.bf16 %v859, %v859
    %v873 = vpack.c.bf16 %v861, %v861
    %v874 = vpack.c.bf16 %v863, %v863
    %v875 = vpack.c.bf16 %v865, %v865
    %v876 = vpack.c.bf16 %v867, %v867
    %v877 = vpack.c.bf16 %v869, %v869
    %v878 = vunpack.c.l.bf16 %v870
    %v879 = vunpack.c.l.bf16 %v871
    %v880 = vunpack.c.l.bf16 %v872
    %v881 = vunpack.c.l.bf16 %v873
    %v882 = vunpack.c.l.bf16 %v874
    %v883 = vunpack.c.l.bf16 %v875
    %v884 = vunpack.c.l.bf16 %v876
    %v885 = vunpack.c.l.bf16 %v877
    %886 = vadd.xlane.f32.xlu0 %v878
    %v887 = vpop.xlane.xlu0 %886
    %888 = vadd.xlane.f32.xlu0 %v879
    %v889 = vpop.xlane.xlu0 %888
    %890 = vadd.xlane.f32.xlu0 %v880
    %v891 = vpop.xlane.xlu0 %890
    %892 = vadd.xlane.f32.xlu0 %v881
    %v893 = vpop.xlane.xlu0 %892
    %894 = vadd.xlane.f32.xlu0 %v882
    %v895 = vpop.xlane.xlu0 %894
    %896 = vadd.xlane.f32.xlu0 %v883
    %v897 = vpop.xlane.xlu0 %896
    %898 = vadd.xlane.f32.xlu0 %v884
    %v899 = vpop.xlane.xlu0 %898
    %900 = vadd.xlane.f32.xlu0 %v885
    %v901 = vpop.xlane.xlu0 %900
    %v902 = vsub.f32 %v774, 0.69921875
    %v903 = vsub.f32 %v775, 0.69921875
    %v904 = vsub.f32 %v776, 0.69921875
    %v905 = vsub.f32 %v777, 0.69921875
    %v906 = vsub.f32 %v778, 0.69921875
    %v907 = vsub.f32 %v779, 0.69921875
    %v908 = vsub.f32 %v780, 0.69921875
    %v909 = vsub.f32 %v781, 0.69921875
    %v910 = vpack.c.bf16 %v902, %v902
    %v911 = vpack.c.bf16 %v903, %v903
    %v912 = vpack.c.bf16 %v904, %v904
    %v913 = vpack.c.bf16 %v905, %v905
    %v914 = vpack.c.bf16 %v906, %v906
    %v915 = vpack.c.bf16 %v907, %v907
    %v916 = vpack.c.bf16 %v908, %v908
    %v917 = vpack.c.bf16 %v909, %v909
    %v918 = vunpack.c.l.bf16 %v910
    %v919 = vunpack.c.l.bf16 %v911
    %v920 = vunpack.c.l.bf16 %v912
    %v921 = vunpack.c.l.bf16 %v913
    %v922 = vunpack.c.l.bf16 %v914
    %v923 = vunpack.c.l.bf16 %v915
    %v924 = vunpack.c.l.bf16 %v916
    %v925 = vunpack.c.l.bf16 %v917
    %v926 = vmul.f32 %v918, %v918
    %v927 = vmul.f32 %v919, %v919
    %v928 = vmul.f32 %v920, %v920
    %v929 = vmul.f32 %v921, %v921
    %v930 = vmul.f32 %v922, %v922
    %v931 = vmul.f32 %v923, %v923
    %v932 = vmul.f32 %v924, %v924
    %v933 = vmul.f32 %v925, %v925
    %v934 = vpack.c.bf16 %v926, %v926
    %v935 = vpack.c.bf16 %v927, %v927
    %v936 = vpack.c.bf16 %v928, %v928
    %v937 = vpack.c.bf16 %v929, %v929
    %v938 = vpack.c.bf16 %v930, %v930
    %v939 = vpack.c.bf16 %v931, %v931
    %v940 = vpack.c.bf16 %v932, %v932
    %v941 = vpack.c.bf16 %v933, %v933
    %v942 = vunpack.c.l.bf16 %v934
    %v943 = vunpack.c.l.bf16 %v935
    %v944 = vunpack.c.l.bf16 %v936
    %v945 = vunpack.c.l.bf16 %v937
    %v946 = vunpack.c.l.bf16 %v938
    %v947 = vunpack.c.l.bf16 %v939
    %v948 = vunpack.c.l.bf16 %v940
    %v949 = vunpack.c.l.bf16 %v941
    %v950 = vmul.f32 %v942, -50.0
    %v951 = vmul.f32 %v943, -50.0
    %v952 = vmul.f32 %v944, -50.0
    %v953 = vmul.f32 %v945, -50.0
    %v954 = vmul.f32 %v946, -50.0
    %v955 = vmul.f32 %v947, -50.0
    %v956 = vmul.f32 %v948, -50.0
    %v957 = vmul.f32 %v949, -50.0
    %v958 = vpack.c.bf16 %v950, %v950
    %v959 = vpack.c.bf16 %v951, %v951
    %v960 = vpack.c.bf16 %v952, %v952
    %v961 = vpack.c.bf16 %v953, %v953
    %v962 = vpack.c.bf16 %v954, %v954
    %v963 = vpack.c.bf16 %v955, %v955
    %v964 = vpack.c.bf16 %v956, %v956
    %v965 = vpack.c.bf16 %v957, %v957
    %v966 = vunpack.c.l.bf16 %v958
    %v967 = vunpack.c.l.bf16 %v959
    %v968 = vunpack.c.l.bf16 %v960
    %v969 = vunpack.c.l.bf16 %v961
    %v970 = vunpack.c.l.bf16 %v962
    %v971 = vunpack.c.l.bf16 %v963
    %v972 = vunpack.c.l.bf16 %v964
    %v973 = vunpack.c.l.bf16 %v965
    %v974 = vmul.f32 %v966, 1.442695
    %v975 = vpow.pop %v974
    %v976 = vmul.f32 %v967, 1.442695
    %v977 = vpow.pop %v976
    %v978 = vmul.f32 %v968, 1.442695
    %v979 = vpow.pop %v978
    %v980 = vmul.f32 %v969, 1.442695
    %v981 = vpow.pop %v980
    %v982 = vmul.f32 %v970, 1.442695
    %v983 = vpow.pop %v982
    %v984 = vmul.f32 %v971, 1.442695
    %v985 = vpow.pop %v984
    %v986 = vmul.f32 %v972, 1.442695
    %v987 = vpow.pop %v986
    %v988 = vmul.f32 %v973, 1.442695
    %v989 = vpow.pop %v988
    %v990 = vpack.c.bf16 %v975, %v975
    %v991 = vpack.c.bf16 %v977, %v977
    %v992 = vpack.c.bf16 %v979, %v979
    %v993 = vpack.c.bf16 %v981, %v981
    %v994 = vpack.c.bf16 %v983, %v983
    %v995 = vpack.c.bf16 %v985, %v985
    %v996 = vpack.c.bf16 %v987, %v987
    %v997 = vpack.c.bf16 %v989, %v989
    %v998 = vunpack.c.l.bf16 %v990
    %v999 = vunpack.c.l.bf16 %v991
    %v1000 = vunpack.c.l.bf16 %v992
    %v1001 = vunpack.c.l.bf16 %v993
    %v1002 = vunpack.c.l.bf16 %v994
    %v1003 = vunpack.c.l.bf16 %v995
    %v1004 = vunpack.c.l.bf16 %v996
    %v1005 = vunpack.c.l.bf16 %v997
    %1006 = vadd.xlane.f32.xlu0 %v998
    %v1007 = vpop.xlane.xlu0 %1006
    %1008 = vadd.xlane.f32.xlu0 %v999
    %v1009 = vpop.xlane.xlu0 %1008
    %1010 = vadd.xlane.f32.xlu0 %v1000
    %v1011 = vpop.xlane.xlu0 %1010
    %1012 = vadd.xlane.f32.xlu0 %v1001
    %v1013 = vpop.xlane.xlu0 %1012
    %1014 = vadd.xlane.f32.xlu0 %v1002
    %v1015 = vpop.xlane.xlu0 %1014
    %1016 = vadd.xlane.f32.xlu0 %v1003
    %v1017 = vpop.xlane.xlu0 %1016
    %1018 = vadd.xlane.f32.xlu0 %v1004
    %v1019 = vpop.xlane.xlu0 %1018
    %1020 = vadd.xlane.f32.xlu0 %v1005
    %v1021 = vpop.xlane.xlu0 %1020
    %v1022 = vsub.f32 %v774, 0.5
    %v1023 = vsub.f32 %v775, 0.5
    %v1024 = vsub.f32 %v776, 0.5
    %v1025 = vsub.f32 %v777, 0.5
    %v1026 = vsub.f32 %v778, 0.5
    %v1027 = vsub.f32 %v779, 0.5
    %v1028 = vsub.f32 %v780, 0.5
    %v1029 = vsub.f32 %v781, 0.5
    %v1030 = vpack.c.bf16 %v1022, %v1022
    %v1031 = vpack.c.bf16 %v1023, %v1023
    %v1032 = vpack.c.bf16 %v1024, %v1024
    %v1033 = vpack.c.bf16 %v1025, %v1025
    %v1034 = vpack.c.bf16 %v1026, %v1026
    %v1035 = vpack.c.bf16 %v1027, %v1027
    %v1036 = vpack.c.bf16 %v1028, %v1028
    %v1037 = vpack.c.bf16 %v1029, %v1029
    %v1038 = vunpack.c.l.bf16 %v1030
    %v1039 = vunpack.c.l.bf16 %v1031
    %v1040 = vunpack.c.l.bf16 %v1032
    %v1041 = vunpack.c.l.bf16 %v1033
    %v1042 = vunpack.c.l.bf16 %v1034
    %v1043 = vunpack.c.l.bf16 %v1035
    %v1044 = vunpack.c.l.bf16 %v1036
    %v1045 = vunpack.c.l.bf16 %v1037
    %v1046 = vmul.f32 %v1038, %v1038
    %v1047 = vmul.f32 %v1039, %v1039
    %v1048 = vmul.f32 %v1040, %v1040
    %v1049 = vmul.f32 %v1041, %v1041
    %v1050 = vmul.f32 %v1042, %v1042
    %v1051 = vmul.f32 %v1043, %v1043
    %v1052 = vmul.f32 %v1044, %v1044
    %v1053 = vmul.f32 %v1045, %v1045
    %v1054 = vpack.c.bf16 %v1046, %v1046
    %v1055 = vpack.c.bf16 %v1047, %v1047
    %v1056 = vpack.c.bf16 %v1048, %v1048
    %v1057 = vpack.c.bf16 %v1049, %v1049
    %v1058 = vpack.c.bf16 %v1050, %v1050
    %v1059 = vpack.c.bf16 %v1051, %v1051
    %v1060 = vpack.c.bf16 %v1052, %v1052
    %v1061 = vpack.c.bf16 %v1053, %v1053
    %v1062 = vunpack.c.l.bf16 %v1054
    %v1063 = vunpack.c.l.bf16 %v1055
    %v1064 = vunpack.c.l.bf16 %v1056
    %v1065 = vunpack.c.l.bf16 %v1057
    %v1066 = vunpack.c.l.bf16 %v1058
    %v1067 = vunpack.c.l.bf16 %v1059
    %v1068 = vunpack.c.l.bf16 %v1060
    %v1069 = vunpack.c.l.bf16 %v1061
    %v1070 = vmul.f32 %v1062, -50.0
    %v1071 = vmul.f32 %v1063, -50.0
    %v1072 = vmul.f32 %v1064, -50.0
    %v1073 = vmul.f32 %v1065, -50.0
    %v1074 = vmul.f32 %v1066, -50.0
    %v1075 = vmul.f32 %v1067, -50.0
    %v1076 = vmul.f32 %v1068, -50.0
    %v1077 = vmul.f32 %v1069, -50.0
    %v1078 = vpack.c.bf16 %v1070, %v1070
    %v1079 = vpack.c.bf16 %v1071, %v1071
    %v1080 = vpack.c.bf16 %v1072, %v1072
    %v1081 = vpack.c.bf16 %v1073, %v1073
    %v1082 = vpack.c.bf16 %v1074, %v1074
    %v1083 = vpack.c.bf16 %v1075, %v1075
    %v1084 = vpack.c.bf16 %v1076, %v1076
    %v1085 = vpack.c.bf16 %v1077, %v1077
    %v1086 = vunpack.c.l.bf16 %v1078
    %v1087 = vunpack.c.l.bf16 %v1079
    %v1088 = vunpack.c.l.bf16 %v1080
    %v1089 = vunpack.c.l.bf16 %v1081
    %v1090 = vunpack.c.l.bf16 %v1082
    %v1091 = vunpack.c.l.bf16 %v1083
    %v1092 = vunpack.c.l.bf16 %v1084
    %v1093 = vunpack.c.l.bf16 %v1085
    %v1094 = vmul.f32 %v1086, 1.442695
    %v1095 = vpow.pop %v1094
    %v1096 = vmul.f32 %v1087, 1.442695
    %v1097 = vpow.pop %v1096
    %v1098 = vmul.f32 %v1088, 1.442695
    %v1099 = vpow.pop %v1098
    %v1100 = vmul.f32 %v1089, 1.442695
    %v1101 = vpow.pop %v1100
    %v1102 = vmul.f32 %v1090, 1.442695
    %v1103 = vpow.pop %v1102
    %v1104 = vmul.f32 %v1091, 1.442695
    %v1105 = vpow.pop %v1104
    %v1106 = vmul.f32 %v1092, 1.442695
    %v1107 = vpow.pop %v1106
    %v1108 = vmul.f32 %v1093, 1.442695
    %v1109 = vpow.pop %v1108
    %v1110 = vpack.c.bf16 %v1095, %v1095
    %v1111 = vpack.c.bf16 %v1097, %v1097
    %v1112 = vpack.c.bf16 %v1099, %v1099
    %v1113 = vpack.c.bf16 %v1101, %v1101
    %v1114 = vpack.c.bf16 %v1103, %v1103
    %v1115 = vpack.c.bf16 %v1105, %v1105
    %v1116 = vpack.c.bf16 %v1107, %v1107
    %v1117 = vpack.c.bf16 %v1109, %v1109
    %v1118 = vunpack.c.l.bf16 %v1110
    %v1119 = vunpack.c.l.bf16 %v1111
    %v1120 = vunpack.c.l.bf16 %v1112
    %v1121 = vunpack.c.l.bf16 %v1113
    %v1122 = vunpack.c.l.bf16 %v1114
    %v1123 = vunpack.c.l.bf16 %v1115
    %v1124 = vunpack.c.l.bf16 %v1116
    %v1125 = vunpack.c.l.bf16 %v1117
    %1126 = vadd.xlane.f32.xlu0 %v1118
    %v1127 = vpop.xlane.xlu0 %1126
    %1128 = vadd.xlane.f32.xlu0 %v1119
    %v1129 = vpop.xlane.xlu0 %1128
    %1130 = vadd.xlane.f32.xlu0 %v1120
    %v1131 = vpop.xlane.xlu0 %1130
    %1132 = vadd.xlane.f32.xlu0 %v1121
    %v1133 = vpop.xlane.xlu0 %1132
    %1134 = vadd.xlane.f32.xlu0 %v1122
    %v1135 = vpop.xlane.xlu0 %1134
    %1136 = vadd.xlane.f32.xlu0 %v1123
    %v1137 = vpop.xlane.xlu0 %1136
    %1138 = vadd.xlane.f32.xlu0 %v1124
    %v1139 = vpop.xlane.xlu0 %1138
    %1140 = vadd.xlane.f32.xlu0 %v1125
    %v1141 = vpop.xlane.xlu0 %1140
    %v1142 = vsub.f32 %v774, 0.30078125
    %v1143 = vsub.f32 %v775, 0.30078125
    %v1144 = vsub.f32 %v776, 0.30078125
    %v1145 = vsub.f32 %v777, 0.30078125
    %v1146 = vsub.f32 %v778, 0.30078125
    %v1147 = vsub.f32 %v779, 0.30078125
    %v1148 = vsub.f32 %v780, 0.30078125
    %v1149 = vsub.f32 %v781, 0.30078125
    %v1150 = vpack.c.bf16 %v1142, %v1142
    %v1151 = vpack.c.bf16 %v1143, %v1143
    %v1152 = vpack.c.bf16 %v1144, %v1144
    %v1153 = vpack.c.bf16 %v1145, %v1145
    %v1154 = vpack.c.bf16 %v1146, %v1146
    %v1155 = vpack.c.bf16 %v1147, %v1147
    %v1156 = vpack.c.bf16 %v1148, %v1148
    %v1157 = vpack.c.bf16 %v1149, %v1149
    %v1158 = vunpack.c.l.bf16 %v1150
    %v1159 = vunpack.c.l.bf16 %v1151
    %v1160 = vunpack.c.l.bf16 %v1152
    %v1161 = vunpack.c.l.bf16 %v1153
    %v1162 = vunpack.c.l.bf16 %v1154
    %v1163 = vunpack.c.l.bf16 %v1155
    %v1164 = vunpack.c.l.bf16 %v1156
    %v1165 = vunpack.c.l.bf16 %v1157
    %v1166 = vmul.f32 %v1158, %v1158
    %v1167 = vmul.f32 %v1159, %v1159
    %v1168 = vmul.f32 %v1160, %v1160
    %v1169 = vmul.f32 %v1161, %v1161
    %v1170 = vmul.f32 %v1162, %v1162
    %v1171 = vmul.f32 %v1163, %v1163
    %v1172 = vmul.f32 %v1164, %v1164
    %v1173 = vmul.f32 %v1165, %v1165
    %v1174 = vpack.c.bf16 %v1166, %v1166
    %v1175 = vpack.c.bf16 %v1167, %v1167
    %v1176 = vpack.c.bf16 %v1168, %v1168
    %v1177 = vpack.c.bf16 %v1169, %v1169
    %v1178 = vpack.c.bf16 %v1170, %v1170
    %v1179 = vpack.c.bf16 %v1171, %v1171
    %v1180 = vpack.c.bf16 %v1172, %v1172
    %v1181 = vpack.c.bf16 %v1173, %v1173
    %v1182 = vunpack.c.l.bf16 %v1174
    %v1183 = vunpack.c.l.bf16 %v1175
    %v1184 = vunpack.c.l.bf16 %v1176
    %v1185 = vunpack.c.l.bf16 %v1177
    %v1186 = vunpack.c.l.bf16 %v1178
    %v1187 = vunpack.c.l.bf16 %v1179
    %v1188 = vunpack.c.l.bf16 %v1180
    %v1189 = vunpack.c.l.bf16 %v1181
    %v1190 = vmul.f32 %v1182, -50.0
    %v1191 = vmul.f32 %v1183, -50.0
    %v1192 = vmul.f32 %v1184, -50.0
    %v1193 = vmul.f32 %v1185, -50.0
    %v1194 = vmul.f32 %v1186, -50.0
    %v1195 = vmul.f32 %v1187, -50.0
    %v1196 = vmul.f32 %v1188, -50.0
    %v1197 = vmul.f32 %v1189, -50.0
    %v1198 = vpack.c.bf16 %v1190, %v1190
    %v1199 = vpack.c.bf16 %v1191, %v1191
    %v1200 = vpack.c.bf16 %v1192, %v1192
    %v1201 = vpack.c.bf16 %v1193, %v1193
    %v1202 = vpack.c.bf16 %v1194, %v1194
    %v1203 = vpack.c.bf16 %v1195, %v1195
    %v1204 = vpack.c.bf16 %v1196, %v1196
    %v1205 = vpack.c.bf16 %v1197, %v1197
    %v1206 = vunpack.c.l.bf16 %v1198
    %v1207 = vunpack.c.l.bf16 %v1199
    %v1208 = vunpack.c.l.bf16 %v1200
    %v1209 = vunpack.c.l.bf16 %v1201
    %v1210 = vunpack.c.l.bf16 %v1202
    %v1211 = vunpack.c.l.bf16 %v1203
    %v1212 = vunpack.c.l.bf16 %v1204
    %v1213 = vunpack.c.l.bf16 %v1205
    %v1214 = vmul.f32 %v1206, 1.442695
    %v1215 = vpow.pop %v1214
    %v1216 = vmul.f32 %v1207, 1.442695
    %v1217 = vpow.pop %v1216
    %v1218 = vmul.f32 %v1208, 1.442695
    %v1219 = vpow.pop %v1218
    %v1220 = vmul.f32 %v1209, 1.442695
    %v1221 = vpow.pop %v1220
    %v1222 = vmul.f32 %v1210, 1.442695
    %v1223 = vpow.pop %v1222
    %v1224 = vmul.f32 %v1211, 1.442695
    %v1225 = vpow.pop %v1224
    %v1226 = vmul.f32 %v1212, 1.442695
    %v1227 = vpow.pop %v1226
    %v1228 = vmul.f32 %v1213, 1.442695
    %v1229 = vpow.pop %v1228
    %v1230 = vpack.c.bf16 %v1215, %v1215
    %v1231 = vpack.c.bf16 %v1217, %v1217
    %v1232 = vpack.c.bf16 %v1219, %v1219
    %v1233 = vpack.c.bf16 %v1221, %v1221
    %v1234 = vpack.c.bf16 %v1223, %v1223
    %v1235 = vpack.c.bf16 %v1225, %v1225
    %v1236 = vpack.c.bf16 %v1227, %v1227
    %v1237 = vpack.c.bf16 %v1229, %v1229
    %v1238 = vunpack.c.l.bf16 %v1230
    %v1239 = vunpack.c.l.bf16 %v1231
    %v1240 = vunpack.c.l.bf16 %v1232
    %v1241 = vunpack.c.l.bf16 %v1233
    %v1242 = vunpack.c.l.bf16 %v1234
    %v1243 = vunpack.c.l.bf16 %v1235
    %v1244 = vunpack.c.l.bf16 %v1236
    %v1245 = vunpack.c.l.bf16 %v1237
    %1246 = vadd.xlane.f32.xlu0 %v1238
    %v1247 = vpop.xlane.xlu0 %1246
    %1248 = vadd.xlane.f32.xlu0 %v1239
    %v1249 = vpop.xlane.xlu0 %1248
    %1250 = vadd.xlane.f32.xlu0 %v1240
    %v1251 = vpop.xlane.xlu0 %1250
    %1252 = vadd.xlane.f32.xlu0 %v1241
    %v1253 = vpop.xlane.xlu0 %1252
    %1254 = vadd.xlane.f32.xlu0 %v1242
    %v1255 = vpop.xlane.xlu0 %1254
    %1256 = vadd.xlane.f32.xlu0 %v1243
    %v1257 = vpop.xlane.xlu0 %1256
    %1258 = vadd.xlane.f32.xlu0 %v1244
    %v1259 = vpop.xlane.xlu0 %1258
    %1260 = vadd.xlane.f32.xlu0 %v1245
    %v1261 = vpop.xlane.xlu0 %1260
    %v1262 = vsub.f32 %v774, 0.100097656
    %v1263 = vsub.f32 %v775, 0.100097656
    %v1264 = vsub.f32 %v776, 0.100097656
    %v1265 = vsub.f32 %v777, 0.100097656
    %v1266 = vsub.f32 %v778, 0.100097656
    %v1267 = vsub.f32 %v779, 0.100097656
    %v1268 = vsub.f32 %v780, 0.100097656
    %v1269 = vsub.f32 %v781, 0.100097656
    %v1270 = vpack.c.bf16 %v1262, %v1262
    %v1271 = vpack.c.bf16 %v1263, %v1263
    %v1272 = vpack.c.bf16 %v1264, %v1264
    %v1273 = vpack.c.bf16 %v1265, %v1265
    %v1274 = vpack.c.bf16 %v1266, %v1266
    %v1275 = vpack.c.bf16 %v1267, %v1267
    %v1276 = vpack.c.bf16 %v1268, %v1268
    %v1277 = vpack.c.bf16 %v1269, %v1269
    %v1278 = vunpack.c.l.bf16 %v1270
    %v1279 = vunpack.c.l.bf16 %v1271
    %v1280 = vunpack.c.l.bf16 %v1272
    %v1281 = vunpack.c.l.bf16 %v1273
    %v1282 = vunpack.c.l.bf16 %v1274
    %v1283 = vunpack.c.l.bf16 %v1275
    %v1284 = vunpack.c.l.bf16 %v1276
    %v1285 = vunpack.c.l.bf16 %v1277
    %v1286 = vmul.f32 %v1278, %v1278
    %v1287 = vmul.f32 %v1279, %v1279
    %v1288 = vmul.f32 %v1280, %v1280
    %v1289 = vmul.f32 %v1281, %v1281
    %v1290 = vmul.f32 %v1282, %v1282
    %v1291 = vmul.f32 %v1283, %v1283
    %v1292 = vmul.f32 %v1284, %v1284
    %v1293 = vmul.f32 %v1285, %v1285
    %v1294 = vpack.c.bf16 %v1286, %v1286
    %v1295 = vpack.c.bf16 %v1287, %v1287
    %v1296 = vpack.c.bf16 %v1288, %v1288
    %v1297 = vpack.c.bf16 %v1289, %v1289
    %v1298 = vpack.c.bf16 %v1290, %v1290
    %v1299 = vpack.c.bf16 %v1291, %v1291
    %v1300 = vpack.c.bf16 %v1292, %v1292
    %v1301 = vpack.c.bf16 %v1293, %v1293
    %v1302 = vunpack.c.l.bf16 %v1294
    %v1303 = vunpack.c.l.bf16 %v1295
    %v1304 = vunpack.c.l.bf16 %v1296
    %v1305 = vunpack.c.l.bf16 %v1297
    %v1306 = vunpack.c.l.bf16 %v1298
    %v1307 = vunpack.c.l.bf16 %v1299
    %v1308 = vunpack.c.l.bf16 %v1300
    %v1309 = vunpack.c.l.bf16 %v1301
    %v1310 = vmul.f32 %v1302, -50.0
    %v1311 = vmul.f32 %v1303, -50.0
    %v1312 = vmul.f32 %v1304, -50.0
    %v1313 = vmul.f32 %v1305, -50.0
    %v1314 = vmul.f32 %v1306, -50.0
    %v1315 = vmul.f32 %v1307, -50.0
    %v1316 = vmul.f32 %v1308, -50.0
    %v1317 = vmul.f32 %v1309, -50.0
    %v1318 = vpack.c.bf16 %v1310, %v1310
    %v1319 = vpack.c.bf16 %v1311, %v1311
    %v1320 = vpack.c.bf16 %v1312, %v1312
    %v1321 = vpack.c.bf16 %v1313, %v1313
    %v1322 = vpack.c.bf16 %v1314, %v1314
    %v1323 = vpack.c.bf16 %v1315, %v1315
    %v1324 = vpack.c.bf16 %v1316, %v1316
    %v1325 = vpack.c.bf16 %v1317, %v1317
    %v1326 = vunpack.c.l.bf16 %v1318
    %v1327 = vunpack.c.l.bf16 %v1319
    %v1328 = vunpack.c.l.bf16 %v1320
    %v1329 = vunpack.c.l.bf16 %v1321
    %v1330 = vunpack.c.l.bf16 %v1322
    %v1331 = vunpack.c.l.bf16 %v1323
    %v1332 = vunpack.c.l.bf16 %v1324
    %v1333 = vunpack.c.l.bf16 %v1325
    %v1334 = vmul.f32 %v1326, 1.442695
    %v1335 = vpow.pop %v1334
    %v1336 = vmul.f32 %v1327, 1.442695
    %v1337 = vpow.pop %v1336
    %v1338 = vmul.f32 %v1328, 1.442695
    %v1339 = vpow.pop %v1338
    %v1340 = vmul.f32 %v1329, 1.442695
    %v1341 = vpow.pop %v1340
    %v1342 = vmul.f32 %v1330, 1.442695
    %v1343 = vpow.pop %v1342
    %v1344 = vmul.f32 %v1331, 1.442695
    %v1345 = vpow.pop %v1344
    %v1346 = vmul.f32 %v1332, 1.442695
    %v1347 = vpow.pop %v1346
    %v1348 = vmul.f32 %v1333, 1.442695
    %v1349 = vpow.pop %v1348
    %v1350 = vpack.c.bf16 %v1335, %v1335
    %v1351 = vpack.c.bf16 %v1337, %v1337
    %v1352 = vpack.c.bf16 %v1339, %v1339
    %v1353 = vpack.c.bf16 %v1341, %v1341
    %v1354 = vpack.c.bf16 %v1343, %v1343
    %v1355 = vpack.c.bf16 %v1345, %v1345
    %v1356 = vpack.c.bf16 %v1347, %v1347
    %v1357 = vpack.c.bf16 %v1349, %v1349
    %v1358 = vunpack.c.l.bf16 %v1350
    %v1359 = vunpack.c.l.bf16 %v1351
    %v1360 = vunpack.c.l.bf16 %v1352
    %v1361 = vunpack.c.l.bf16 %v1353
    %v1362 = vunpack.c.l.bf16 %v1354
    %v1363 = vunpack.c.l.bf16 %v1355
    %v1364 = vunpack.c.l.bf16 %v1356
    %v1365 = vunpack.c.l.bf16 %v1357
    %1366 = vadd.xlane.f32.xlu0 %v1358
    %v1367 = vpop.xlane.xlu0 %1366
    %1368 = vadd.xlane.f32.xlu0 %v1359
    %v1369 = vpop.xlane.xlu0 %1368
    %1370 = vadd.xlane.f32.xlu0 %v1360
    %v1371 = vpop.xlane.xlu0 %1370
    %1372 = vadd.xlane.f32.xlu0 %v1361
    %v1373 = vpop.xlane.xlu0 %1372
    %1374 = vadd.xlane.f32.xlu0 %v1362
    %v1375 = vpop.xlane.xlu0 %1374
    %1376 = vadd.xlane.f32.xlu0 %v1363
    %v1377 = vpop.xlane.xlu0 %1376
    %1378 = vadd.xlane.f32.xlu0 %v1364
    %v1379 = vpop.xlane.xlu0 %1378
    %1380 = vadd.xlane.f32.xlu0 %v1365
    %v1381 = vpop.xlane.xlu0 %1380
    %v1382 = vsub.f32 %v774, -0.100097656
    %v1383 = vsub.f32 %v775, -0.100097656
    %v1384 = vsub.f32 %v776, -0.100097656
    %v1385 = vsub.f32 %v777, -0.100097656
    %v1386 = vsub.f32 %v778, -0.100097656
    %v1387 = vsub.f32 %v779, -0.100097656
    %v1388 = vsub.f32 %v780, -0.100097656
    %v1389 = vsub.f32 %v781, -0.100097656
    %v1390 = vpack.c.bf16 %v1382, %v1382
    %v1391 = vpack.c.bf16 %v1383, %v1383
    %v1392 = vpack.c.bf16 %v1384, %v1384
    %v1393 = vpack.c.bf16 %v1385, %v1385
    %v1394 = vpack.c.bf16 %v1386, %v1386
    %v1395 = vpack.c.bf16 %v1387, %v1387
    %v1396 = vpack.c.bf16 %v1388, %v1388
    %v1397 = vpack.c.bf16 %v1389, %v1389
    %v1398 = vunpack.c.l.bf16 %v1390
    %v1399 = vunpack.c.l.bf16 %v1391
    %v1400 = vunpack.c.l.bf16 %v1392
    %v1401 = vunpack.c.l.bf16 %v1393
    %v1402 = vunpack.c.l.bf16 %v1394
    %v1403 = vunpack.c.l.bf16 %v1395
    %v1404 = vunpack.c.l.bf16 %v1396
    %v1405 = vunpack.c.l.bf16 %v1397
    %v1406 = vmul.f32 %v1398, %v1398
    %v1407 = vmul.f32 %v1399, %v1399
    %v1408 = vmul.f32 %v1400, %v1400
    %v1409 = vmul.f32 %v1401, %v1401
    %v1410 = vmul.f32 %v1402, %v1402
    %v1411 = vmul.f32 %v1403, %v1403
    %v1412 = vmul.f32 %v1404, %v1404
    %v1413 = vmul.f32 %v1405, %v1405
    %v1414 = vpack.c.bf16 %v1406, %v1406
    %v1415 = vpack.c.bf16 %v1407, %v1407
    %v1416 = vpack.c.bf16 %v1408, %v1408
    %v1417 = vpack.c.bf16 %v1409, %v1409
    %v1418 = vpack.c.bf16 %v1410, %v1410
    %v1419 = vpack.c.bf16 %v1411, %v1411
    %v1420 = vpack.c.bf16 %v1412, %v1412
    %v1421 = vpack.c.bf16 %v1413, %v1413
    %v1422 = vunpack.c.l.bf16 %v1414
    %v1423 = vunpack.c.l.bf16 %v1415
    %v1424 = vunpack.c.l.bf16 %v1416
    %v1425 = vunpack.c.l.bf16 %v1417
    %v1426 = vunpack.c.l.bf16 %v1418
    %v1427 = vunpack.c.l.bf16 %v1419
    %v1428 = vunpack.c.l.bf16 %v1420
    %v1429 = vunpack.c.l.bf16 %v1421
    %v1430 = vmul.f32 %v1422, -50.0
    %v1431 = vmul.f32 %v1423, -50.0
    %v1432 = vmul.f32 %v1424, -50.0
    %v1433 = vmul.f32 %v1425, -50.0
    %v1434 = vmul.f32 %v1426, -50.0
    %v1435 = vmul.f32 %v1427, -50.0
    %v1436 = vmul.f32 %v1428, -50.0
    %v1437 = vmul.f32 %v1429, -50.0
    %v1438 = vpack.c.bf16 %v1430, %v1430
    %v1439 = vpack.c.bf16 %v1431, %v1431
    %v1440 = vpack.c.bf16 %v1432, %v1432
    %v1441 = vpack.c.bf16 %v1433, %v1433
    %v1442 = vpack.c.bf16 %v1434, %v1434
    %v1443 = vpack.c.bf16 %v1435, %v1435
    %v1444 = vpack.c.bf16 %v1436, %v1436
    %v1445 = vpack.c.bf16 %v1437, %v1437
    %v1446 = vunpack.c.l.bf16 %v1438
    %v1447 = vunpack.c.l.bf16 %v1439
    %v1448 = vunpack.c.l.bf16 %v1440
    %v1449 = vunpack.c.l.bf16 %v1441
    %v1450 = vunpack.c.l.bf16 %v1442
    %v1451 = vunpack.c.l.bf16 %v1443
    %v1452 = vunpack.c.l.bf16 %v1444
    %v1453 = vunpack.c.l.bf16 %v1445
    %v1454 = vmul.f32 %v1446, 1.442695
    %v1455 = vpow.pop %v1454
    %v1456 = vmul.f32 %v1447, 1.442695
    %v1457 = vpow.pop %v1456
    %v1458 = vmul.f32 %v1448, 1.442695
    %v1459 = vpow.pop %v1458
    %v1460 = vmul.f32 %v1449, 1.442695
    %v1461 = vpow.pop %v1460
    %v1462 = vmul.f32 %v1450, 1.442695
    %v1463 = vpow.pop %v1462
    %v1464 = vmul.f32 %v1451, 1.442695
    %v1465 = vpow.pop %v1464
    %v1466 = vmul.f32 %v1452, 1.442695
    %v1467 = vpow.pop %v1466
    %v1468 = vmul.f32 %v1453, 1.442695
    %v1469 = vpow.pop %v1468
    %v1470 = vpack.c.bf16 %v1455, %v1455
    %v1471 = vpack.c.bf16 %v1457, %v1457
    %v1472 = vpack.c.bf16 %v1459, %v1459
    %v1473 = vpack.c.bf16 %v1461, %v1461
    %v1474 = vpack.c.bf16 %v1463, %v1463
    %v1475 = vpack.c.bf16 %v1465, %v1465
    %v1476 = vpack.c.bf16 %v1467, %v1467
    %v1477 = vpack.c.bf16 %v1469, %v1469
    %v1478 = vunpack.c.l.bf16 %v1470
    %v1479 = vunpack.c.l.bf16 %v1471
    %v1480 = vunpack.c.l.bf16 %v1472
    %v1481 = vunpack.c.l.bf16 %v1473
    %v1482 = vunpack.c.l.bf16 %v1474
    %v1483 = vunpack.c.l.bf16 %v1475
    %v1484 = vunpack.c.l.bf16 %v1476
    %v1485 = vunpack.c.l.bf16 %v1477
    %1486 = vadd.xlane.f32.xlu0 %v1478
    %v1487 = vpop.xlane.xlu0 %1486
    %1488 = vadd.xlane.f32.xlu0 %v1479
    %v1489 = vpop.xlane.xlu0 %1488
    %1490 = vadd.xlane.f32.xlu0 %v1480
    %v1491 = vpop.xlane.xlu0 %1490
    %1492 = vadd.xlane.f32.xlu0 %v1481
    %v1493 = vpop.xlane.xlu0 %1492
    %1494 = vadd.xlane.f32.xlu0 %v1482
    %v1495 = vpop.xlane.xlu0 %1494
    %1496 = vadd.xlane.f32.xlu0 %v1483
    %v1497 = vpop.xlane.xlu0 %1496
    %1498 = vadd.xlane.f32.xlu0 %v1484
    %v1499 = vpop.xlane.xlu0 %1498
    %1500 = vadd.xlane.f32.xlu0 %v1485
    %v1501 = vpop.xlane.xlu0 %1500
    %v1502 = vsub.f32 %v774, -0.30078125
    %v1503 = vsub.f32 %v775, -0.30078125
    %v1504 = vsub.f32 %v776, -0.30078125
    %v1505 = vsub.f32 %v777, -0.30078125
    %v1506 = vsub.f32 %v778, -0.30078125
    %v1507 = vsub.f32 %v779, -0.30078125
    %v1508 = vsub.f32 %v780, -0.30078125
    %v1509 = vsub.f32 %v781, -0.30078125
    %v1510 = vpack.c.bf16 %v1502, %v1502
    %v1511 = vpack.c.bf16 %v1503, %v1503
    %v1512 = vpack.c.bf16 %v1504, %v1504
    %v1513 = vpack.c.bf16 %v1505, %v1505
    %v1514 = vpack.c.bf16 %v1506, %v1506
    %v1515 = vpack.c.bf16 %v1507, %v1507
    %v1516 = vpack.c.bf16 %v1508, %v1508
    %v1517 = vpack.c.bf16 %v1509, %v1509
    %v1518 = vunpack.c.l.bf16 %v1510
    %v1519 = vunpack.c.l.bf16 %v1511
    %v1520 = vunpack.c.l.bf16 %v1512
    %v1521 = vunpack.c.l.bf16 %v1513
    %v1522 = vunpack.c.l.bf16 %v1514
    %v1523 = vunpack.c.l.bf16 %v1515
    %v1524 = vunpack.c.l.bf16 %v1516
    %v1525 = vunpack.c.l.bf16 %v1517
    %v1526 = vmul.f32 %v1518, %v1518
    %v1527 = vmul.f32 %v1519, %v1519
    %v1528 = vmul.f32 %v1520, %v1520
    %v1529 = vmul.f32 %v1521, %v1521
    %v1530 = vmul.f32 %v1522, %v1522
    %v1531 = vmul.f32 %v1523, %v1523
    %v1532 = vmul.f32 %v1524, %v1524
    %v1533 = vmul.f32 %v1525, %v1525
    %v1534 = vpack.c.bf16 %v1526, %v1526
    %v1535 = vpack.c.bf16 %v1527, %v1527
    %v1536 = vpack.c.bf16 %v1528, %v1528
    %v1537 = vpack.c.bf16 %v1529, %v1529
    %v1538 = vpack.c.bf16 %v1530, %v1530
    %v1539 = vpack.c.bf16 %v1531, %v1531
    %v1540 = vpack.c.bf16 %v1532, %v1532
    %v1541 = vpack.c.bf16 %v1533, %v1533
    %v1542 = vunpack.c.l.bf16 %v1534
    %v1543 = vunpack.c.l.bf16 %v1535
    %v1544 = vunpack.c.l.bf16 %v1536
    %v1545 = vunpack.c.l.bf16 %v1537
    %v1546 = vunpack.c.l.bf16 %v1538
    %v1547 = vunpack.c.l.bf16 %v1539
    %v1548 = vunpack.c.l.bf16 %v1540
    %v1549 = vunpack.c.l.bf16 %v1541
    %v1550 = vmul.f32 %v1542, -50.0
    %v1551 = vmul.f32 %v1543, -50.0
    %v1552 = vmul.f32 %v1544, -50.0
    %v1553 = vmul.f32 %v1545, -50.0
    %v1554 = vmul.f32 %v1546, -50.0
    %v1555 = vmul.f32 %v1547, -50.0
    %v1556 = vmul.f32 %v1548, -50.0
    %v1557 = vmul.f32 %v1549, -50.0
    %v1558 = vpack.c.bf16 %v1550, %v1550
    %v1559 = vpack.c.bf16 %v1551, %v1551
    %v1560 = vpack.c.bf16 %v1552, %v1552
    %v1561 = vpack.c.bf16 %v1553, %v1553
    %v1562 = vpack.c.bf16 %v1554, %v1554
    %v1563 = vpack.c.bf16 %v1555, %v1555
    %v1564 = vpack.c.bf16 %v1556, %v1556
    %v1565 = vpack.c.bf16 %v1557, %v1557
    %v1566 = vunpack.c.l.bf16 %v1558
    %v1567 = vunpack.c.l.bf16 %v1559
    %v1568 = vunpack.c.l.bf16 %v1560
    %v1569 = vunpack.c.l.bf16 %v1561
    %v1570 = vunpack.c.l.bf16 %v1562
    %v1571 = vunpack.c.l.bf16 %v1563
    %v1572 = vunpack.c.l.bf16 %v1564
    %v1573 = vunpack.c.l.bf16 %v1565
    %v1574 = vmul.f32 %v1566, 1.442695
    %v1575 = vpow.pop %v1574
    %v1576 = vmul.f32 %v1567, 1.442695
    %v1577 = vpow.pop %v1576
    %v1578 = vmul.f32 %v1568, 1.442695
    %v1579 = vpow.pop %v1578
    %v1580 = vmul.f32 %v1569, 1.442695
    %v1581 = vpow.pop %v1580
    %v1582 = vmul.f32 %v1570, 1.442695
    %v1583 = vpow.pop %v1582
    %v1584 = vmul.f32 %v1571, 1.442695
    %v1585 = vpow.pop %v1584
    %v1586 = vmul.f32 %v1572, 1.442695
    %v1587 = vpow.pop %v1586
    %v1588 = vmul.f32 %v1573, 1.442695
    %v1589 = vpow.pop %v1588
    %v1590 = vpack.c.bf16 %v1575, %v1575
    %v1591 = vpack.c.bf16 %v1577, %v1577
    %v1592 = vpack.c.bf16 %v1579, %v1579
    %v1593 = vpack.c.bf16 %v1581, %v1581
    %v1594 = vpack.c.bf16 %v1583, %v1583
    %v1595 = vpack.c.bf16 %v1585, %v1585
    %v1596 = vpack.c.bf16 %v1587, %v1587
    %v1597 = vpack.c.bf16 %v1589, %v1589
    %v1598 = vunpack.c.l.bf16 %v1590
    %v1599 = vunpack.c.l.bf16 %v1591
    %v1600 = vunpack.c.l.bf16 %v1592
    %v1601 = vunpack.c.l.bf16 %v1593
    %v1602 = vunpack.c.l.bf16 %v1594
    %v1603 = vunpack.c.l.bf16 %v1595
    %v1604 = vunpack.c.l.bf16 %v1596
    %v1605 = vunpack.c.l.bf16 %v1597
    %1606 = vadd.xlane.f32.xlu0 %v1598
    %v1607 = vpop.xlane.xlu0 %1606
    %1608 = vadd.xlane.f32.xlu0 %v1599
    %v1609 = vpop.xlane.xlu0 %1608
    %1610 = vadd.xlane.f32.xlu0 %v1600
    %v1611 = vpop.xlane.xlu0 %1610
    %1612 = vadd.xlane.f32.xlu0 %v1601
    %v1613 = vpop.xlane.xlu0 %1612
    %1614 = vadd.xlane.f32.xlu0 %v1602
    %v1615 = vpop.xlane.xlu0 %1614
    %1616 = vadd.xlane.f32.xlu0 %v1603
    %v1617 = vpop.xlane.xlu0 %1616
    %1618 = vadd.xlane.f32.xlu0 %v1604
    %v1619 = vpop.xlane.xlu0 %1618
    %1620 = vadd.xlane.f32.xlu0 %v1605
    %v1621 = vpop.xlane.xlu0 %1620
    %v1622 = vsub.f32 %v774, -0.5
    %v1623 = vsub.f32 %v775, -0.5
    %v1624 = vsub.f32 %v776, -0.5
    %v1625 = vsub.f32 %v777, -0.5
    %v1626 = vsub.f32 %v778, -0.5
    %v1627 = vsub.f32 %v779, -0.5
    %v1628 = vsub.f32 %v780, -0.5
    %v1629 = vsub.f32 %v781, -0.5
    %v1630 = vpack.c.bf16 %v1622, %v1622
    %v1631 = vpack.c.bf16 %v1623, %v1623
    %v1632 = vpack.c.bf16 %v1624, %v1624
    %v1633 = vpack.c.bf16 %v1625, %v1625
    %v1634 = vpack.c.bf16 %v1626, %v1626
    %v1635 = vpack.c.bf16 %v1627, %v1627
    %v1636 = vpack.c.bf16 %v1628, %v1628
    %v1637 = vpack.c.bf16 %v1629, %v1629
    %v1638 = vunpack.c.l.bf16 %v1630
    %v1639 = vunpack.c.l.bf16 %v1631
    %v1640 = vunpack.c.l.bf16 %v1632
    %v1641 = vunpack.c.l.bf16 %v1633
    %v1642 = vunpack.c.l.bf16 %v1634
    %v1643 = vunpack.c.l.bf16 %v1635
    %v1644 = vunpack.c.l.bf16 %v1636
    %v1645 = vunpack.c.l.bf16 %v1637
    %v1646 = vmul.f32 %v1638, %v1638
    %v1647 = vmul.f32 %v1639, %v1639
    %v1648 = vmul.f32 %v1640, %v1640
    %v1649 = vmul.f32 %v1641, %v1641
    %v1650 = vmul.f32 %v1642, %v1642
    %v1651 = vmul.f32 %v1643, %v1643
    %v1652 = vmul.f32 %v1644, %v1644
    %v1653 = vmul.f32 %v1645, %v1645
    %v1654 = vpack.c.bf16 %v1646, %v1646
    %v1655 = vpack.c.bf16 %v1647, %v1647
    %v1656 = vpack.c.bf16 %v1648, %v1648
    %v1657 = vpack.c.bf16 %v1649, %v1649
    %v1658 = vpack.c.bf16 %v1650, %v1650
    %v1659 = vpack.c.bf16 %v1651, %v1651
    %v1660 = vpack.c.bf16 %v1652, %v1652
    %v1661 = vpack.c.bf16 %v1653, %v1653
    %v1662 = vunpack.c.l.bf16 %v1654
    %v1663 = vunpack.c.l.bf16 %v1655
    %v1664 = vunpack.c.l.bf16 %v1656
    %v1665 = vunpack.c.l.bf16 %v1657
    %v1666 = vunpack.c.l.bf16 %v1658
    %v1667 = vunpack.c.l.bf16 %v1659
    %v1668 = vunpack.c.l.bf16 %v1660
    %v1669 = vunpack.c.l.bf16 %v1661
    %v1670 = vmul.f32 %v1662, -50.0
    %v1671 = vmul.f32 %v1663, -50.0
    %v1672 = vmul.f32 %v1664, -50.0
    %v1673 = vmul.f32 %v1665, -50.0
    %v1674 = vmul.f32 %v1666, -50.0
    %v1675 = vmul.f32 %v1667, -50.0
    %v1676 = vmul.f32 %v1668, -50.0
    %v1677 = vmul.f32 %v1669, -50.0
    %v1678 = vpack.c.bf16 %v1670, %v1670
    %v1679 = vpack.c.bf16 %v1671, %v1671
    %v1680 = vpack.c.bf16 %v1672, %v1672
    %v1681 = vpack.c.bf16 %v1673, %v1673
    %v1682 = vpack.c.bf16 %v1674, %v1674
    %v1683 = vpack.c.bf16 %v1675, %v1675
    %v1684 = vpack.c.bf16 %v1676, %v1676
    %v1685 = vpack.c.bf16 %v1677, %v1677
    %v1686 = vunpack.c.l.bf16 %v1678
    %v1687 = vunpack.c.l.bf16 %v1679
    %v1688 = vunpack.c.l.bf16 %v1680
    %v1689 = vunpack.c.l.bf16 %v1681
    %v1690 = vunpack.c.l.bf16 %v1682
    %v1691 = vunpack.c.l.bf16 %v1683
    %v1692 = vunpack.c.l.bf16 %v1684
    %v1693 = vunpack.c.l.bf16 %v1685
    %v1694 = vmul.f32 %v1686, 1.442695
    %v1695 = vpow.pop %v1694
    %v1696 = vmul.f32 %v1687, 1.442695
    %v1697 = vpow.pop %v1696
    %v1698 = vmul.f32 %v1688, 1.442695
    %v1699 = vpow.pop %v1698
    %v1700 = vmul.f32 %v1689, 1.442695
    %v1701 = vpow.pop %v1700
    %v1702 = vmul.f32 %v1690, 1.442695
    %v1703 = vpow.pop %v1702
    %v1704 = vmul.f32 %v1691, 1.442695
    %v1705 = vpow.pop %v1704
    %v1706 = vmul.f32 %v1692, 1.442695
    %v1707 = vpow.pop %v1706
    %v1708 = vmul.f32 %v1693, 1.442695
    %v1709 = vpow.pop %v1708
    %v1710 = vpack.c.bf16 %v1695, %v1695
    %v1711 = vpack.c.bf16 %v1697, %v1697
    %v1712 = vpack.c.bf16 %v1699, %v1699
    %v1713 = vpack.c.bf16 %v1701, %v1701
    %v1714 = vpack.c.bf16 %v1703, %v1703
    %v1715 = vpack.c.bf16 %v1705, %v1705
    %v1716 = vpack.c.bf16 %v1707, %v1707
    %v1717 = vpack.c.bf16 %v1709, %v1709
    %v1718 = vunpack.c.l.bf16 %v1710
    %v1719 = vunpack.c.l.bf16 %v1711
    %v1720 = vunpack.c.l.bf16 %v1712
    %v1721 = vunpack.c.l.bf16 %v1713
    %v1722 = vunpack.c.l.bf16 %v1714
    %v1723 = vunpack.c.l.bf16 %v1715
    %v1724 = vunpack.c.l.bf16 %v1716
    %v1725 = vunpack.c.l.bf16 %v1717
    %1726 = vadd.xlane.f32.xlu0 %v1718
    %v1727 = vpop.xlane.xlu0 %1726
    %1728 = vadd.xlane.f32.xlu0 %v1719
    %v1729 = vpop.xlane.xlu0 %1728
    %1730 = vadd.xlane.f32.xlu0 %v1720
    %v1731 = vpop.xlane.xlu0 %1730
    %1732 = vadd.xlane.f32.xlu0 %v1721
    %v1733 = vpop.xlane.xlu0 %1732
    %1734 = vadd.xlane.f32.xlu0 %v1722
    %v1735 = vpop.xlane.xlu0 %1734
    %1736 = vadd.xlane.f32.xlu0 %v1723
    %v1737 = vpop.xlane.xlu0 %1736
    %1738 = vadd.xlane.f32.xlu0 %v1724
    %v1739 = vpop.xlane.xlu0 %1738
    %1740 = vadd.xlane.f32.xlu0 %v1725
    %v1741 = vpop.xlane.xlu0 %1740
    %v1742 = vsub.f32 %v774, -0.69921875
    %v1743 = vsub.f32 %v775, -0.69921875
    %v1744 = vsub.f32 %v776, -0.69921875
    %v1745 = vsub.f32 %v777, -0.69921875
    %v1746 = vsub.f32 %v778, -0.69921875
    %v1747 = vsub.f32 %v779, -0.69921875
    %v1748 = vsub.f32 %v780, -0.69921875
    %v1749 = vsub.f32 %v781, -0.69921875
    %v1750 = vpack.c.bf16 %v1742, %v1742
    %v1751 = vpack.c.bf16 %v1743, %v1743
    %v1752 = vpack.c.bf16 %v1744, %v1744
    %v1753 = vpack.c.bf16 %v1745, %v1745
    %v1754 = vpack.c.bf16 %v1746, %v1746
    %v1755 = vpack.c.bf16 %v1747, %v1747
    %v1756 = vpack.c.bf16 %v1748, %v1748
    %v1757 = vpack.c.bf16 %v1749, %v1749
    %v1758 = vunpack.c.l.bf16 %v1750
    %v1759 = vunpack.c.l.bf16 %v1751
    %v1760 = vunpack.c.l.bf16 %v1752
    %v1761 = vunpack.c.l.bf16 %v1753
    %v1762 = vunpack.c.l.bf16 %v1754
    %v1763 = vunpack.c.l.bf16 %v1755
    %v1764 = vunpack.c.l.bf16 %v1756
    %v1765 = vunpack.c.l.bf16 %v1757
    %v1766 = vmul.f32 %v1758, %v1758
    %v1767 = vmul.f32 %v1759, %v1759
    %v1768 = vmul.f32 %v1760, %v1760
    %v1769 = vmul.f32 %v1761, %v1761
    %v1770 = vmul.f32 %v1762, %v1762
    %v1771 = vmul.f32 %v1763, %v1763
    %v1772 = vmul.f32 %v1764, %v1764
    %v1773 = vmul.f32 %v1765, %v1765
    %v1774 = vpack.c.bf16 %v1766, %v1766
    %v1775 = vpack.c.bf16 %v1767, %v1767
    %v1776 = vpack.c.bf16 %v1768, %v1768
    %v1777 = vpack.c.bf16 %v1769, %v1769
    %v1778 = vpack.c.bf16 %v1770, %v1770
    %v1779 = vpack.c.bf16 %v1771, %v1771
    %v1780 = vpack.c.bf16 %v1772, %v1772
    %v1781 = vpack.c.bf16 %v1773, %v1773
    %v1782 = vunpack.c.l.bf16 %v1774
    %v1783 = vunpack.c.l.bf16 %v1775
    %v1784 = vunpack.c.l.bf16 %v1776
    %v1785 = vunpack.c.l.bf16 %v1777
    %v1786 = vunpack.c.l.bf16 %v1778
    %v1787 = vunpack.c.l.bf16 %v1779
    %v1788 = vunpack.c.l.bf16 %v1780
    %v1789 = vunpack.c.l.bf16 %v1781
    %v1790 = vmul.f32 %v1782, -50.0
    %v1791 = vmul.f32 %v1783, -50.0
    %v1792 = vmul.f32 %v1784, -50.0
    %v1793 = vmul.f32 %v1785, -50.0
    %v1794 = vmul.f32 %v1786, -50.0
    %v1795 = vmul.f32 %v1787, -50.0
    %v1796 = vmul.f32 %v1788, -50.0
    %v1797 = vmul.f32 %v1789, -50.0
    %v1798 = vpack.c.bf16 %v1790, %v1790
    %v1799 = vpack.c.bf16 %v1791, %v1791
    %v1800 = vpack.c.bf16 %v1792, %v1792
    %v1801 = vpack.c.bf16 %v1793, %v1793
    %v1802 = vpack.c.bf16 %v1794, %v1794
    %v1803 = vpack.c.bf16 %v1795, %v1795
    %v1804 = vpack.c.bf16 %v1796, %v1796
    %v1805 = vpack.c.bf16 %v1797, %v1797
    %v1806 = vunpack.c.l.bf16 %v1798
    %v1807 = vunpack.c.l.bf16 %v1799
    %v1808 = vunpack.c.l.bf16 %v1800
    %v1809 = vunpack.c.l.bf16 %v1801
    %v1810 = vunpack.c.l.bf16 %v1802
    %v1811 = vunpack.c.l.bf16 %v1803
    %v1812 = vunpack.c.l.bf16 %v1804
    %v1813 = vunpack.c.l.bf16 %v1805
    %v1814 = vmul.f32 %v1806, 1.442695
    %v1815 = vpow.pop %v1814
    %v1816 = vmul.f32 %v1807, 1.442695
    %v1817 = vpow.pop %v1816
    %v1818 = vmul.f32 %v1808, 1.442695
    %v1819 = vpow.pop %v1818
    %v1820 = vmul.f32 %v1809, 1.442695
    %v1821 = vpow.pop %v1820
    %v1822 = vmul.f32 %v1810, 1.442695
    %v1823 = vpow.pop %v1822
    %v1824 = vmul.f32 %v1811, 1.442695
    %v1825 = vpow.pop %v1824
    %v1826 = vmul.f32 %v1812, 1.442695
    %v1827 = vpow.pop %v1826
    %v1828 = vmul.f32 %v1813, 1.442695
    %v1829 = vpow.pop %v1828
    %v1830 = vpack.c.bf16 %v1815, %v1815
    %v1831 = vpack.c.bf16 %v1817, %v1817
    %v1832 = vpack.c.bf16 %v1819, %v1819
    %v1833 = vpack.c.bf16 %v1821, %v1821
    %v1834 = vpack.c.bf16 %v1823, %v1823
    %v1835 = vpack.c.bf16 %v1825, %v1825
    %v1836 = vpack.c.bf16 %v1827, %v1827
    %v1837 = vpack.c.bf16 %v1829, %v1829
    %v1838 = vunpack.c.l.bf16 %v1830
    %v1839 = vunpack.c.l.bf16 %v1831
    %v1840 = vunpack.c.l.bf16 %v1832
    %v1841 = vunpack.c.l.bf16 %v1833
    %v1842 = vunpack.c.l.bf16 %v1834
    %v1843 = vunpack.c.l.bf16 %v1835
    %v1844 = vunpack.c.l.bf16 %v1836
    %v1845 = vunpack.c.l.bf16 %v1837
    %1846 = vadd.xlane.f32.xlu0 %v1838
    %v1847 = vpop.xlane.xlu0 %1846
    %1848 = vadd.xlane.f32.xlu0 %v1839
    %v1849 = vpop.xlane.xlu0 %1848
    %1850 = vadd.xlane.f32.xlu0 %v1840
    %v1851 = vpop.xlane.xlu0 %1850
    %1852 = vadd.xlane.f32.xlu0 %v1841
    %v1853 = vpop.xlane.xlu0 %1852
    %1854 = vadd.xlane.f32.xlu0 %v1842
    %v1855 = vpop.xlane.xlu0 %1854
    %1856 = vadd.xlane.f32.xlu0 %v1843
    %v1857 = vpop.xlane.xlu0 %1856
    %1858 = vadd.xlane.f32.xlu0 %v1844
    %v1859 = vpop.xlane.xlu0 %1858
    %1860 = vadd.xlane.f32.xlu0 %v1845
    %v1861 = vpop.xlane.xlu0 %1860
    %v1862 = vsub.f32 %v774, -0.8984375
    %v1863 = vsub.f32 %v775, -0.8984375
    %v1864 = vsub.f32 %v776, -0.8984375
    %v1865 = vsub.f32 %v777, -0.8984375
    %v1866 = vsub.f32 %v778, -0.8984375
    %v1867 = vsub.f32 %v779, -0.8984375
    %v1868 = vsub.f32 %v780, -0.8984375
    %v1869 = vsub.f32 %v781, -0.8984375
    %v1870 = vpack.c.bf16 %v1862, %v1862
    %v1871 = vpack.c.bf16 %v1863, %v1863
    %v1872 = vpack.c.bf16 %v1864, %v1864
    %v1873 = vpack.c.bf16 %v1865, %v1865
    %v1874 = vpack.c.bf16 %v1866, %v1866
    %v1875 = vpack.c.bf16 %v1867, %v1867
    %v1876 = vpack.c.bf16 %v1868, %v1868
    %v1877 = vpack.c.bf16 %v1869, %v1869
    %v1878 = vunpack.c.l.bf16 %v1870
    %v1879 = vunpack.c.l.bf16 %v1871
    %v1880 = vunpack.c.l.bf16 %v1872
    %v1881 = vunpack.c.l.bf16 %v1873
    %v1882 = vunpack.c.l.bf16 %v1874
    %v1883 = vunpack.c.l.bf16 %v1875
    %v1884 = vunpack.c.l.bf16 %v1876
    %v1885 = vunpack.c.l.bf16 %v1877
    %v1886 = vmul.f32 %v1878, %v1878
    %v1887 = vmul.f32 %v1879, %v1879
    %v1888 = vmul.f32 %v1880, %v1880
    %v1889 = vmul.f32 %v1881, %v1881
    %v1890 = vmul.f32 %v1882, %v1882
    %v1891 = vmul.f32 %v1883, %v1883
    %v1892 = vmul.f32 %v1884, %v1884
    %v1893 = vmul.f32 %v1885, %v1885
    %v1894 = vpack.c.bf16 %v1886, %v1886
    %v1895 = vpack.c.bf16 %v1887, %v1887
    %v1896 = vpack.c.bf16 %v1888, %v1888
    %v1897 = vpack.c.bf16 %v1889, %v1889
    %v1898 = vpack.c.bf16 %v1890, %v1890
    %v1899 = vpack.c.bf16 %v1891, %v1891
    %v1900 = vpack.c.bf16 %v1892, %v1892
    %v1901 = vpack.c.bf16 %v1893, %v1893
    %v1902 = vunpack.c.l.bf16 %v1894
    %v1903 = vunpack.c.l.bf16 %v1895
    %v1904 = vunpack.c.l.bf16 %v1896
    %v1905 = vunpack.c.l.bf16 %v1897
    %v1906 = vunpack.c.l.bf16 %v1898
    %v1907 = vunpack.c.l.bf16 %v1899
    %v1908 = vunpack.c.l.bf16 %v1900
    %v1909 = vunpack.c.l.bf16 %v1901
    %v1910 = vmul.f32 %v1902, -50.0
    %v1911 = vmul.f32 %v1903, -50.0
    %v1912 = vmul.f32 %v1904, -50.0
    %v1913 = vmul.f32 %v1905, -50.0
    %v1914 = vmul.f32 %v1906, -50.0
    %v1915 = vmul.f32 %v1907, -50.0
    %v1916 = vmul.f32 %v1908, -50.0
    %v1917 = vmul.f32 %v1909, -50.0
    %v1918 = vpack.c.bf16 %v1910, %v1910
    %v1919 = vpack.c.bf16 %v1911, %v1911
    %v1920 = vpack.c.bf16 %v1912, %v1912
    %v1921 = vpack.c.bf16 %v1913, %v1913
    %v1922 = vpack.c.bf16 %v1914, %v1914
    %v1923 = vpack.c.bf16 %v1915, %v1915
    %v1924 = vpack.c.bf16 %v1916, %v1916
    %v1925 = vpack.c.bf16 %v1917, %v1917
    %v1926 = vunpack.c.l.bf16 %v1918
    %v1927 = vunpack.c.l.bf16 %v1919
    %v1928 = vunpack.c.l.bf16 %v1920
    %v1929 = vunpack.c.l.bf16 %v1921
    %v1930 = vunpack.c.l.bf16 %v1922
    %v1931 = vunpack.c.l.bf16 %v1923
    %v1932 = vunpack.c.l.bf16 %v1924
    %v1933 = vunpack.c.l.bf16 %v1925
    %v1934 = vmul.f32 %v1926, 1.442695
    %v1935 = vpow.pop %v1934
    %v1936 = vmul.f32 %v1927, 1.442695
    %v1937 = vpow.pop %v1936
    %v1938 = vmul.f32 %v1928, 1.442695
    %v1939 = vpow.pop %v1938
    %v1940 = vmul.f32 %v1929, 1.442695
    %v1941 = vpow.pop %v1940
    %v1942 = vmul.f32 %v1930, 1.442695
    %v1943 = vpow.pop %v1942
    %v1944 = vmul.f32 %v1931, 1.442695
    %v1945 = vpow.pop %v1944
    %v1946 = vmul.f32 %v1932, 1.442695
    %v1947 = vpow.pop %v1946
    %v1948 = vmul.f32 %v1933, 1.442695
    %v1949 = vpow.pop %v1948
    %v1950 = vpack.c.bf16 %v1935, %v1935
    %v1951 = vpack.c.bf16 %v1937, %v1937
    %v1952 = vpack.c.bf16 %v1939, %v1939
    %v1953 = vpack.c.bf16 %v1941, %v1941
    %v1954 = vpack.c.bf16 %v1943, %v1943
    %v1955 = vpack.c.bf16 %v1945, %v1945
    %v1956 = vpack.c.bf16 %v1947, %v1947
    %v1957 = vpack.c.bf16 %v1949, %v1949
    %v1958 = vunpack.c.l.bf16 %v1950
    %v1959 = vunpack.c.l.bf16 %v1951
    %v1960 = vunpack.c.l.bf16 %v1952
    %v1961 = vunpack.c.l.bf16 %v1953
    %v1962 = vunpack.c.l.bf16 %v1954
    %v1963 = vunpack.c.l.bf16 %v1955
    %v1964 = vunpack.c.l.bf16 %v1956
    %v1965 = vunpack.c.l.bf16 %v1957
    %1966 = vadd.xlane.f32.xlu0 %v1958
    %v1967 = vpop.xlane.xlu0 %1966
    %1968 = vadd.xlane.f32.xlu0 %v1959
    %v1969 = vpop.xlane.xlu0 %1968
    %1970 = vadd.xlane.f32.xlu0 %v1960
    %v1971 = vpop.xlane.xlu0 %1970
    %1972 = vadd.xlane.f32.xlu0 %v1961
    %v1973 = vpop.xlane.xlu0 %1972
    %1974 = vadd.xlane.f32.xlu0 %v1962
    %v1975 = vpop.xlane.xlu0 %1974
    %1976 = vadd.xlane.f32.xlu0 %v1963
    %v1977 = vpop.xlane.xlu0 %1976
    %1978 = vadd.xlane.f32.xlu0 %v1964
    %v1979 = vpop.xlane.xlu0 %1978
    %1980 = vadd.xlane.f32.xlu0 %v1965
    %v1981 = vpop.xlane.xlu0 %1980
    %v1982 = vld [vmem:[#allocation2] sm:$0xff]
    %v1983 = vld [vmem:[#allocation2 + $0x8] sm:$0xff]
    %v1984 = vld [vmem:[#allocation2 + $0x10] sm:$0xff]
    %v1985 = vld [vmem:[#allocation2 + $0x18] sm:$0xff]
    %v1986 = vld [vmem:[#allocation2 + $0x20] sm:$0xff]
    %v1987 = vld [vmem:[#allocation2 + $0x28] sm:$0xff]
    %v1988 = vld [vmem:[#allocation2 + $0x30] sm:$0xff]
    %v1989 = vld [vmem:[#allocation2 + $0x38] sm:$0xff]
    %v1990 = vld [vmem:[#allocation2 + $0x40] sm:$0xff]
    %v1991 = vld [vmem:[#allocation2 + $0x48] sm:$0xff]
    %v1992 = vld [vmem:[#allocation2 + $0x50] sm:$0xff]
    %2081 = vset.pattern.permute.xlu0 0
    %2082 = vperm.xlu0 %2081, %v751
    %v2083 = vpop.permute.xlu0 %2082
    %2084 = vset.pattern.permute.xlu0 0
    %2085 = vperm.xlu0 %2084, %v753
    %v2086 = vpop.permute.xlu0 %2085
    %2087 = vset.pattern.permute.xlu0 0
    %2088 = vperm.xlu0 %2087, %v755
    %v2089 = vpop.permute.xlu0 %2088
    %2090 = vset.pattern.permute.xlu0 0
    %2091 = vperm.xlu0 %2090, %v757
    %v2092 = vpop.permute.xlu0 %2091
    %2093 = vset.pattern.permute.xlu0 0
    %2094 = vperm.xlu0 %2093, %v759
    %v2095 = vpop.permute.xlu0 %2094
    %2096 = vset.pattern.permute.xlu0 0
    %2097 = vperm.xlu0 %2096, %v761
    %v2098 = vpop.permute.xlu0 %2097
    %2099 = vset.pattern.permute.xlu0 0
    %2100 = vperm.xlu0 %2099, %v763
    %v2101 = vpop.permute.xlu0 %2100
    %2102 = vset.pattern.permute.xlu0 0
    %2103 = vperm.xlu0 %2102, %v765
    %v2104 = vpop.permute.xlu0 %2103
    %2105 = vset.pattern.permute.xlu0 0
    %2106 = vperm.xlu0 %2105, %v887
    %v2107 = vpop.permute.xlu0 %2106
    %2108 = vset.pattern.permute.xlu0 0
    %2109 = vperm.xlu0 %2108, %v889
    %v2110 = vpop.permute.xlu0 %2109
    %2111 = vset.pattern.permute.xlu0 0
    %2112 = vperm.xlu0 %2111, %v891
    %v2113 = vpop.permute.xlu0 %2112
    %2114 = vset.pattern.permute.xlu0 0
    %2115 = vperm.xlu0 %2114, %v893
    %v2116 = vpop.permute.xlu0 %2115
    %2117 = vset.pattern.permute.xlu0 0
    %2118 = vperm.xlu0 %2117, %v895
    %v2119 = vpop.permute.xlu0 %2118
    %2120 = vset.pattern.permute.xlu0 0
    %2121 = vperm.xlu0 %2120, %v897
    %v2122 = vpop.permute.xlu0 %2121
    %2123 = vset.pattern.permute.xlu0 0
    %2124 = vperm.xlu0 %2123, %v899
    %v2125 = vpop.permute.xlu0 %2124
    %2126 = vset.pattern.permute.xlu0 0
    %2127 = vperm.xlu0 %2126, %v901
    %v2128 = vpop.permute.xlu0 %2127
    %2129 = vset.pattern.permute.xlu0 0
    %2130 = vperm.xlu0 %2129, %v1007
    %v2131 = vpop.permute.xlu0 %2130
    %2132 = vset.pattern.permute.xlu0 0
    %2133 = vperm.xlu0 %2132, %v1009
    %v2134 = vpop.permute.xlu0 %2133
    %2135 = vset.pattern.permute.xlu0 0
    %2136 = vperm.xlu0 %2135, %v1011
    %v2137 = vpop.permute.xlu0 %2136
    %2138 = vset.pattern.permute.xlu0 0
    %2139 = vperm.xlu0 %2138, %v1013
    %v2140 = vpop.permute.xlu0 %2139
    %2141 = vset.pattern.permute.xlu0 0
    %2142 = vperm.xlu0 %2141, %v1015
    %v2143 = vpop.permute.xlu0 %2142
    %2144 = vset.pattern.permute.xlu0 0
    %2145 = vperm.xlu0 %2144, %v1017
    %v2146 = vpop.permute.xlu0 %2145
    %2147 = vset.pattern.permute.xlu0 0
    %2148 = vperm.xlu0 %2147, %v1019
    %v2149 = vpop.permute.xlu0 %2148
    %2150 = vset.pattern.permute.xlu0 0
    %2151 = vperm.xlu0 %2150, %v1021
    %v2152 = vpop.permute.xlu0 %2151
    %2153 = vset.pattern.permute.xlu0 0
    %2154 = vperm.xlu0 %2153, %v1127
    %v2155 = vpop.permute.xlu0 %2154
    %2156 = vset.pattern.permute.xlu0 0
    %2157 = vperm.xlu0 %2156, %v1129
    %v2158 = vpop.permute.xlu0 %2157
    %2159 = vset.pattern.permute.xlu0 0
    %2160 = vperm.xlu0 %2159, %v1131
    %v2161 = vpop.permute.xlu0 %2160
    %2162 = vset.pattern.permute.xlu0 0
    %2163 = vperm.xlu0 %2162, %v1133
    %v2164 = vpop.permute.xlu0 %2163
    %2165 = vset.pattern.permute.xlu0 0
    %2166 = vperm.xlu0 %2165, %v1135
    %v2167 = vpop.permute.xlu0 %2166
    %2168 = vset.pattern.permute.xlu0 0
    %2169 = vperm.xlu0 %2168, %v1137
    %v2170 = vpop.permute.xlu0 %2169
    %2171 = vset.pattern.permute.xlu0 0
    %2172 = vperm.xlu0 %2171, %v1139
    %v2173 = vpop.permute.xlu0 %2172
    %2174 = vset.pattern.permute.xlu0 0
    %2175 = vperm.xlu0 %2174, %v1141
    %v2176 = vpop.permute.xlu0 %2175
    %2177 = vset.pattern.permute.xlu0 0
    %2178 = vperm.xlu0 %2177, %v1247
    %v2179 = vpop.permute.xlu0 %2178
    %2180 = vset.pattern.permute.xlu0 0
    %2181 = vperm.xlu0 %2180, %v1249
    %v2182 = vpop.permute.xlu0 %2181
    %2183 = vset.pattern.permute.xlu0 0
    %2184 = vperm.xlu0 %2183, %v1251
    %v2185 = vpop.permute.xlu0 %2184
    %2186 = vset.pattern.permute.xlu0 0
    %2187 = vperm.xlu0 %2186, %v1253
    %v2188 = vpop.permute.xlu0 %2187
    %2189 = vset.pattern.permute.xlu0 0
    %2190 = vperm.xlu0 %2189, %v1255
    %v2191 = vpop.permute.xlu0 %2190
    %2192 = vset.pattern.permute.xlu0 0
    %2193 = vperm.xlu0 %2192, %v1257
    %v2194 = vpop.permute.xlu0 %2193
    %2195 = vset.pattern.permute.xlu0 0
    %2196 = vperm.xlu0 %2195, %v1259
    %v2197 = vpop.permute.xlu0 %2196
    %2198 = vset.pattern.permute.xlu0 0
    %2199 = vperm.xlu0 %2198, %v1261
    %v2200 = vpop.permute.xlu0 %2199
    %2201 = vset.pattern.permute.xlu0 0
    %2202 = vperm.xlu0 %2201, %v1367
    %v2203 = vpop.permute.xlu0 %2202
    %2204 = vset.pattern.permute.xlu0 0
    %2205 = vperm.xlu0 %2204, %v1369
    %v2206 = vpop.permute.xlu0 %2205
    %2207 = vset.pattern.permute.xlu0 0
    %2208 = vperm.xlu0 %2207, %v1371
    %v2209 = vpop.permute.xlu0 %2208
    %2210 = vset.pattern.permute.xlu0 0
    %2211 = vperm.xlu0 %2210, %v1373
    %v2212 = vpop.permute.xlu0 %2211
    %2213 = vset.pattern.permute.xlu0 0
    %2214 = vperm.xlu0 %2213, %v1375
    %v2215 = vpop.permute.xlu0 %2214
    %2216 = vset.pattern.permute.xlu0 0
    %2217 = vperm.xlu0 %2216, %v1377
    %v2218 = vpop.permute.xlu0 %2217
    %2219 = vset.pattern.permute.xlu0 0
    %2220 = vperm.xlu0 %2219, %v1379
    %v2221 = vpop.permute.xlu0 %2220
    %2222 = vset.pattern.permute.xlu0 0
    %2223 = vperm.xlu0 %2222, %v1381
    %v2224 = vpop.permute.xlu0 %2223
    %2225 = vset.pattern.permute.xlu0 0
    %2226 = vperm.xlu0 %2225, %v1487
    %v2227 = vpop.permute.xlu0 %2226
    %2228 = vset.pattern.permute.xlu0 0
    %2229 = vperm.xlu0 %2228, %v1489
    %v2230 = vpop.permute.xlu0 %2229
    %2231 = vset.pattern.permute.xlu0 0
    %2232 = vperm.xlu0 %2231, %v1491
    %v2233 = vpop.permute.xlu0 %2232
    %2234 = vset.pattern.permute.xlu0 0
    %2235 = vperm.xlu0 %2234, %v1493
    %v2236 = vpop.permute.xlu0 %2235
    %2237 = vset.pattern.permute.xlu0 0
    %2238 = vperm.xlu0 %2237, %v1495
    %v2239 = vpop.permute.xlu0 %2238
    %2240 = vset.pattern.permute.xlu0 0
    %2241 = vperm.xlu0 %2240, %v1497
    %v2242 = vpop.permute.xlu0 %2241
    %2243 = vset.pattern.permute.xlu0 0
    %2244 = vperm.xlu0 %2243, %v1499
    %v2245 = vpop.permute.xlu0 %2244
    %2246 = vset.pattern.permute.xlu0 0
    %2247 = vperm.xlu0 %2246, %v1501
    %v2248 = vpop.permute.xlu0 %2247
    %2249 = vset.pattern.permute.xlu0 0
    %2250 = vperm.xlu0 %2249, %v1607
    %v2251 = vpop.permute.xlu0 %2250
    %2252 = vset.pattern.permute.xlu0 0
    %2253 = vperm.xlu0 %2252, %v1609
    %v2254 = vpop.permute.xlu0 %2253
    %2255 = vset.pattern.permute.xlu0 0
    %2256 = vperm.xlu0 %2255, %v1611
    %v2257 = vpop.permute.xlu0 %2256
    %2258 = vset.pattern.permute.xlu0 0
    %2259 = vperm.xlu0 %2258, %v1613
    %v2260 = vpop.permute.xlu0 %2259
    %2261 = vset.pattern.permute.xlu0 0
    %2262 = vperm.xlu0 %2261, %v1615
    %v2263 = vpop.permute.xlu0 %2262
    %2264 = vset.pattern.permute.xlu0 0
    %2265 = vperm.xlu0 %2264, %v1617
    %v2266 = vpop.permute.xlu0 %2265
    %2267 = vset.pattern.permute.xlu0 0
    %2268 = vperm.xlu0 %2267, %v1619
    %v2269 = vpop.permute.xlu0 %2268
    %2270 = vset.pattern.permute.xlu0 0
    %2271 = vperm.xlu0 %2270, %v1621
    %v2272 = vpop.permute.xlu0 %2271
    %2273 = vset.pattern.permute.xlu0 0
    %2274 = vperm.xlu0 %2273, %v1727
    %v2275 = vpop.permute.xlu0 %2274
    %2276 = vset.pattern.permute.xlu0 0
    %2277 = vperm.xlu0 %2276, %v1729
    %v2278 = vpop.permute.xlu0 %2277
    %2279 = vset.pattern.permute.xlu0 0
    %2280 = vperm.xlu0 %2279, %v1731
    %v2281 = vpop.permute.xlu0 %2280
    %2282 = vset.pattern.permute.xlu0 0
    %2283 = vperm.xlu0 %2282, %v1733
    %v2284 = vpop.permute.xlu0 %2283
    %2285 = vset.pattern.permute.xlu0 0
    %2286 = vperm.xlu0 %2285, %v1735
    %v2287 = vpop.permute.xlu0 %2286
    %2288 = vset.pattern.permute.xlu0 0
    %2289 = vperm.xlu0 %2288, %v1737
    %v2290 = vpop.permute.xlu0 %2289
    %2291 = vset.pattern.permute.xlu0 0
    %2292 = vperm.xlu0 %2291, %v1739
    %v2293 = vpop.permute.xlu0 %2292
    %2294 = vset.pattern.permute.xlu0 0
    %2295 = vperm.xlu0 %2294, %v1741
    %v2296 = vpop.permute.xlu0 %2295
    %2297 = vset.pattern.permute.xlu0 0
    %2298 = vperm.xlu0 %2297, %v1847
    %v2299 = vpop.permute.xlu0 %2298
    %2300 = vset.pattern.permute.xlu0 0
    %2301 = vperm.xlu0 %2300, %v1849
    %v2302 = vpop.permute.xlu0 %2301
    %2303 = vset.pattern.permute.xlu0 0
    %2304 = vperm.xlu0 %2303, %v1851
    %v2305 = vpop.permute.xlu0 %2304
    %2306 = vset.pattern.permute.xlu0 0
    %2307 = vperm.xlu0 %2306, %v1853
    %v2308 = vpop.permute.xlu0 %2307
    %2309 = vset.pattern.permute.xlu0 0
    %2310 = vperm.xlu0 %2309, %v1855
    %v2311 = vpop.permute.xlu0 %2310
    %2312 = vset.pattern.permute.xlu0 0
    %2313 = vperm.xlu0 %2312, %v1857
    %v2314 = vpop.permute.xlu0 %2313
    %2315 = vset.pattern.permute.xlu0 0
    %2316 = vperm.xlu0 %2315, %v1859
    %v2317 = vpop.permute.xlu0 %2316
    %2318 = vset.pattern.permute.xlu0 0
    %2319 = vperm.xlu0 %2318, %v1861
    %v2320 = vpop.permute.xlu0 %2319
    %2321 = vset.pattern.permute.xlu0 0
    %2322 = vperm.xlu0 %2321, %v1967
    %v2323 = vpop.permute.xlu0 %2322
    %2324 = vset.pattern.permute.xlu0 0
    %2325 = vperm.xlu0 %2324, %v1969
    %v2326 = vpop.permute.xlu0 %2325
    %2327 = vset.pattern.permute.xlu0 0
    %2328 = vperm.xlu0 %2327, %v1971
    %v2329 = vpop.permute.xlu0 %2328
    %2330 = vset.pattern.permute.xlu0 0
    %2331 = vperm.xlu0 %2330, %v1973
    %v2332 = vpop.permute.xlu0 %2331
    %2333 = vset.pattern.permute.xlu0 0
    %2334 = vperm.xlu0 %2333, %v1975
    %v2335 = vpop.permute.xlu0 %2334
    %2336 = vset.pattern.permute.xlu0 0
    %2337 = vperm.xlu0 %2336, %v1977
    %v2338 = vpop.permute.xlu0 %2337
    %2339 = vset.pattern.permute.xlu0 0
    %2340 = vperm.xlu0 %2339, %v1979
    %v2341 = vpop.permute.xlu0 %2340
    %2342 = vset.pattern.permute.xlu0 0
    %2343 = vperm.xlu0 %2342, %v1981
    %v2344 = vpop.permute.xlu0 %2343
    %v2345 = vlaneseq
    %v2346 = vand.u32 %v2345, 127
    %v2347 = vperm.slane %v2083, %v2346
    %v2348 = vperm.slane %v2086, %v2346
    %v2349 = vperm.slane %v2089, %v2346
    %v2350 = vperm.slane %v2092, %v2346
    %v2351 = vperm.slane %v2095, %v2346
    %v2352 = vperm.slane %v2098, %v2346
    %v2353 = vperm.slane %v2101, %v2346
    %v2354 = vperm.slane %v2104, %v2346
    %v2355 = vperm.slane %v2107, %v2346
    %v2356 = vperm.slane %v2110, %v2346
    %v2357 = vperm.slane %v2113, %v2346
    %v2358 = vperm.slane %v2116, %v2346
    %v2359 = vperm.slane %v2119, %v2346
    %v2360 = vperm.slane %v2122, %v2346
    %v2361 = vperm.slane %v2125, %v2346
    %v2362 = vperm.slane %v2128, %v2346
    %v2363 = vperm.slane %v2131, %v2346
    %v2364 = vperm.slane %v2134, %v2346
    %v2365 = vperm.slane %v2137, %v2346
    %v2366 = vperm.slane %v2140, %v2346
    %v2367 = vperm.slane %v2143, %v2346
    %v2368 = vperm.slane %v2146, %v2346
    %v2369 = vperm.slane %v2149, %v2346
    %v2370 = vperm.slane %v2152, %v2346
    %v2371 = vperm.slane %v2155, %v2346
    %v2372 = vperm.slane %v2158, %v2346
    %v2373 = vperm.slane %v2161, %v2346
    %v2374 = vperm.slane %v2164, %v2346
    %v2375 = vperm.slane %v2167, %v2346
    %v2376 = vperm.slane %v2170, %v2346
    %v2377 = vperm.slane %v2173, %v2346
    %v2378 = vperm.slane %v2176, %v2346
    %v2379 = vperm.slane %v2179, %v2346
    %v2380 = vperm.slane %v2182, %v2346
    %v2381 = vperm.slane %v2185, %v2346
    %v2382 = vperm.slane %v2188, %v2346
    %v2383 = vperm.slane %v2191, %v2346
    %v2384 = vperm.slane %v2194, %v2346
    %v2385 = vperm.slane %v2197, %v2346
    %v2386 = vperm.slane %v2200, %v2346
    %v2387 = vperm.slane %v2203, %v2346
    %v2388 = vperm.slane %v2206, %v2346
    %v2389 = vperm.slane %v2209, %v2346
    %v2390 = vperm.slane %v2212, %v2346
    %v2391 = vperm.slane %v2215, %v2346
    %v2392 = vperm.slane %v2218, %v2346
    %v2393 = vperm.slane %v2221, %v2346
    %v2394 = vperm.slane %v2224, %v2346
    %v2395 = vperm.slane %v2227, %v2346
    %v2396 = vperm.slane %v2230, %v2346
    %v2397 = vperm.slane %v2233, %v2346
    %v2398 = vperm.slane %v2236, %v2346
    %v2399 = vperm.slane %v2239, %v2346
    %v2400 = vperm.slane %v2242, %v2346
    %v2401 = vperm.slane %v2245, %v2346
    %v2402 = vperm.slane %v2248, %v2346
    %v2403 = vperm.slane %v2251, %v2346
    %v2404 = vperm.slane %v2254, %v2346
    %v2405 = vperm.slane %v2257, %v2346
    %v2406 = vperm.slane %v2260, %v2346
    %v2407 = vperm.slane %v2263, %v2346
    %v2408 = vperm.slane %v2266, %v2346
    %v2409 = vperm.slane %v2269, %v2346
    %v2410 = vperm.slane %v2272, %v2346
    %v2411 = vperm.slane %v2275, %v2346
    %v2412 = vperm.slane %v2278, %v2346
    %v2413 = vperm.slane %v2281, %v2346
    %v2414 = vperm.slane %v2284, %v2346
    %v2415 = vperm.slane %v2287, %v2346
    %v2416 = vperm.slane %v2290, %v2346
    %v2417 = vperm.slane %v2293, %v2346
    %v2418 = vperm.slane %v2296, %v2346
    %v2419 = vperm.slane %v2299, %v2346
    %v2420 = vperm.slane %v2302, %v2346
    %v2421 = vperm.slane %v2305, %v2346
    %v2422 = vperm.slane %v2308, %v2346
    %v2423 = vperm.slane %v2311, %v2346
    %v2424 = vperm.slane %v2314, %v2346
    %v2425 = vperm.slane %v2317, %v2346
    %v2426 = vperm.slane %v2320, %v2346
    %v2427 = vperm.slane %v2323, %v2346
    %v2428 = vperm.slane %v2326, %v2346
    %v2429 = vperm.slane %v2329, %v2346
    %v2430 = vperm.slane %v2332, %v2346
    %v2431 = vperm.slane %v2335, %v2346
    %v2432 = vperm.slane %v2338, %v2346
    %v2433 = vperm.slane %v2341, %v2346
    %v2434 = vperm.slane %v2344, %v2346
    %vm2435 = vcmask 1041409
    %v2436 = vsel %vm2435, %v2348, %v2347
    %vm2437 = vcmask 1042434
    %v2438 = vsel %vm2437, %v2349, %v2436
    %vm2439 = vcmask 1043459
    %v2440 = vsel %vm2439, %v2350, %v2438
    %vm2441 = vcmask 1044484
    %v2442 = vsel %vm2441, %v2351, %v2440
    %vm2443 = vcmask 1045509
    %v2444 = vsel %vm2443, %v2352, %v2442
    %vm2445 = vcmask 1046534
    %v2446 = vsel %vm2445, %v2353, %v2444
    %vm2447 = vcmask 1047559
    %v2448 = vsel %vm2447, %v2354, %v2446
    %v2449 = vsel %vm2435, %v2356, %v2355
    %v2450 = vsel %vm2437, %v2357, %v2449
    %v2451 = vsel %vm2439, %v2358, %v2450
    %v2452 = vsel %vm2441, %v2359, %v2451
    %v2453 = vsel %vm2443, %v2360, %v2452
    %v2454 = vsel %vm2445, %v2361, %v2453
    %v2455 = vsel %vm2447, %v2362, %v2454
    %v2456 = vsel %vm2435, %v2364, %v2363
    %v2457 = vsel %vm2437, %v2365, %v2456
    %v2458 = vsel %vm2439, %v2366, %v2457
    %v2459 = vsel %vm2441, %v2367, %v2458
    %v2460 = vsel %vm2443, %v2368, %v2459
    %v2461 = vsel %vm2445, %v2369, %v2460
    %v2462 = vsel %vm2447, %v2370, %v2461
    %v2463 = vsel %vm2435, %v2372, %v2371
    %v2464 = vsel %vm2437, %v2373, %v2463
    %v2465 = vsel %vm2439, %v2374, %v2464
    %v2466 = vsel %vm2441, %v2375, %v2465
    %v2467 = vsel %vm2443, %v2376, %v2466
    %v2468 = vsel %vm2445, %v2377, %v2467
    %v2469 = vsel %vm2447, %v2378, %v2468
    %v2470 = vsel %vm2435, %v2380, %v2379
    %v2471 = vsel %vm2437, %v2381, %v2470
    %v2472 = vsel %vm2439, %v2382, %v2471
    %v2473 = vsel %vm2441, %v2383, %v2472
    %v2474 = vsel %vm2443, %v2384, %v2473
    %v2475 = vsel %vm2445, %v2385, %v2474
    %v2476 = vsel %vm2447, %v2386, %v2475
    %v2477 = vsel %vm2435, %v2388, %v2387
    %v2478 = vsel %vm2437, %v2389, %v2477
    %v2479 = vsel %vm2439, %v2390, %v2478
    %v2480 = vsel %vm2441, %v2391, %v2479
    %v2481 = vsel %vm2443, %v2392, %v2480
    %v2482 = vsel %vm2445, %v2393, %v2481
    %v2483 = vsel %vm2447, %v2394, %v2482
    %v2484 = vsel %vm2435, %v2396, %v2395
    %v2485 = vsel %vm2437, %v2397, %v2484
    %v2486 = vsel %vm2439, %v2398, %v2485
    %v2487 = vsel %vm2441, %v2399, %v2486
    %v2488 = vsel %vm2443, %v2400, %v2487
    %v2489 = vsel %vm2445, %v2401, %v2488
    %v2490 = vsel %vm2447, %v2402, %v2489
    %v2491 = vsel %vm2435, %v2404, %v2403
    %v2492 = vsel %vm2437, %v2405, %v2491
    %v2493 = vsel %vm2439, %v2406, %v2492
    %v2494 = vsel %vm2441, %v2407, %v2493
    %v2495 = vsel %vm2443, %v2408, %v2494
    %v2496 = vsel %vm2445, %v2409, %v2495
    %v2497 = vsel %vm2447, %v2410, %v2496
    %v2498 = vsel %vm2435, %v2412, %v2411
    %v2499 = vsel %vm2437, %v2413, %v2498
    %v2500 = vsel %vm2439, %v2414, %v2499
    %v2501 = vsel %vm2441, %v2415, %v2500
    %v2502 = vsel %vm2443, %v2416, %v2501
    %v2503 = vsel %vm2445, %v2417, %v2502
    %v2504 = vsel %vm2447, %v2418, %v2503
    %v2505 = vsel %vm2435, %v2420, %v2419
    %v2506 = vsel %vm2437, %v2421, %v2505
    %v2507 = vsel %vm2439, %v2422, %v2506
    %v2508 = vsel %vm2441, %v2423, %v2507
    %v2509 = vsel %vm2443, %v2424, %v2508
    %v2510 = vsel %vm2445, %v2425, %v2509
    %v2511 = vsel %vm2447, %v2426, %v2510
    %v2512 = vsel %vm2435, %v2428, %v2427
    %v2513 = vsel %vm2437, %v2429, %v2512
    %v2514 = vsel %vm2439, %v2430, %v2513
    %v2515 = vsel %vm2441, %v2431, %v2514
    %v2516 = vsel %vm2443, %v2432, %v2515
    %v2517 = vsel %vm2445, %v2433, %v2516
    %v2518 = vsel %vm2447, %v2434, %v2517
    %v2530 = vadd.f32 %v1982, %v2448
    %v2531 = vadd.f32 %v1983, %v2455
    %v2532 = vadd.f32 %v1984, %v2462
    %v2533 = vadd.f32 %v1985, %v2469
    %v2534 = vadd.f32 %v1986, %v2476
    %v2535 = vadd.f32 %v1987, %v2483
    %v2536 = vadd.f32 %v1988, %v2490
    %v2537 = vadd.f32 %v1989, %v2497
    %v2538 = vadd.f32 %v1990, %v2504
    %v2539 = vadd.f32 %v1991, %v2511
    %v2540 = vadd.f32 %v1992, %v2518
    %vm2541 = vcmask 64512
    %2542 = vst.msk [vmem:[#allocation2] sm:$0xff] %vm2541, %v2530
    %2543 = vst.msk [vmem:[#allocation2 + $0x8] sm:$0xff] %vm2541, %v2531
    %2544 = vst.msk [vmem:[#allocation2 + $0x10] sm:$0xff] %vm2541, %v2532
    %2545 = vst.msk [vmem:[#allocation2 + $0x18] sm:$0xff] %vm2541, %v2533
    %2546 = vst.msk [vmem:[#allocation2 + $0x20] sm:$0xff] %vm2541, %v2534
    %2547 = vst.msk [vmem:[#allocation2 + $0x28] sm:$0xff] %vm2541, %v2535
    %2548 = vst.msk [vmem:[#allocation2 + $0x30] sm:$0xff] %vm2541, %v2536
    %2549 = vst.msk [vmem:[#allocation2 + $0x38] sm:$0xff] %vm2541, %v2537
    %2550 = vst.msk [vmem:[#allocation2 + $0x40] sm:$0xff] %vm2541, %v2538
    %2551 = vst.msk [vmem:[#allocation2 + $0x48] sm:$0xff] %vm2541, %v2539
    %2552 = vst.msk [vmem:[#allocation2 + $0x50] sm:$0xff] %vm2541, %v2540
    // Predicated region
    $region34: #{neural_ir_score.1} parent=1 // pred_check
      %p2553 = pneg %p37
    $region35: #{neural_ir_score.1} parent=1 // pred_check_branch
      %2555 = sbr.rel (%p2553) target = $region37
    $region36: #{neural_ir_score.1} parent=1 // pred_region
      %v2556 = vld [vmem:[%s2] sm:$0xff]
      %v2557 = vld [vmem:[#allocation2] sm:$0xff]
      %v2558 = vld [vmem:[#allocation2 + $0x8] sm:$0xff]
      %v2559 = vld [vmem:[#allocation2 + $0x10] sm:$0xff]
      %v2560 = vld [vmem:[#allocation2 + $0x18] sm:$0xff]
      %v2561 = vld [vmem:[#allocation2 + $0x20] sm:$0xff]
      %v2562 = vld [vmem:[#allocation2 + $0x28] sm:$0xff]
      %v2563 = vld [vmem:[#allocation2 + $0x30] sm:$0xff]
      %v2564 = vld [vmem:[#allocation2 + $0x38] sm:$0xff]
      %v2565 = vld [vmem:[#allocation2 + $0x40] sm:$0xff]
      %v2566 = vld [vmem:[#allocation2 + $0x48] sm:$0xff]
      %v2567 = vld [vmem:[#allocation2 + $0x50] sm:$0xff]
      %v2568 = vmax.f32 %v2557, 1e-10
      %v2569 = vmax.f32 %v2558, 1e-10
      %v2570 = vmax.f32 %v2559, 1e-10
      %v2571 = vmax.f32 %v2560, 1e-10
      %v2572 = vmax.f32 %v2561, 1e-10
      %v2573 = vmax.f32 %v2562, 1e-10
      %v2574 = vmax.f32 %v2563, 1e-10
      %v2575 = vmax.f32 %v2564, 1e-10
      %v2576 = vmax.f32 %v2565, 1e-10
      %v2577 = vmax.f32 %v2566, 1e-10
      %v2578 = vmax.f32 %v2567, 1e-10
      %v2579 = vlog2.pop %v2568
      %v2580 = vmul.f32 %v2579, 0.6931472
      %v2581 = vlog2.pop %v2569
      %v2582 = vmul.f32 %v2581, 0.6931472
      %v2583 = vlog2.pop %v2570
      %v2584 = vmul.f32 %v2583, 0.6931472
      %v2585 = vlog2.pop %v2571
      %v2586 = vmul.f32 %v2585, 0.6931472
      %v2587 = vlog2.pop %v2572
      %v2588 = vmul.f32 %v2587, 0.6931472
      %v2589 = vlog2.pop %v2573
      %v2590 = vmul.f32 %v2589, 0.6931472
      %v2591 = vlog2.pop %v2574
      %v2592 = vmul.f32 %v2591, 0.6931472
      %v2593 = vlog2.pop %v2575
      %v2594 = vmul.f32 %v2593, 0.6931472
      %v2595 = vlog2.pop %v2576
      %v2596 = vmul.f32 %v2595, 0.6931472
      %v2597 = vlog2.pop %v2577
      %v2598 = vmul.f32 %v2597, 0.6931472
      %v2599 = vlog2.pop %v2578
      %v2600 = vmul.f32 %v2599, 0.6931472
      %v2601 = vmul.f32 %v2580, 0.01
      %v2602 = vmul.f32 %v2582, 0.01
      %v2603 = vmul.f32 %v2584, 0.01
      %v2604 = vmul.f32 %v2586, 0.01
      %v2605 = vmul.f32 %v2588, 0.01
      %v2606 = vmul.f32 %v2590, 0.01
      %v2607 = vmul.f32 %v2592, 0.01
      %v2608 = vmul.f32 %v2594, 0.01
      %v2609 = vmul.f32 %v2596, 0.01
      %v2610 = vmul.f32 %v2598, 0.01
      %v2611 = vmul.f32 %v2600, 0.01
      %v2612 = vmul.f32 %v2601, %v2556
      %v2613 = vmul.f32 %v2602, %v2556
      %v2614 = vmul.f32 %v2603, %v2556
      %v2615 = vmul.f32 %v2604, %v2556
      %v2616 = vmul.f32 %v2605, %v2556
      %v2617 = vmul.f32 %v2606, %v2556
      %v2618 = vmul.f32 %v2607, %v2556
      %v2619 = vmul.f32 %v2608, %v2556
      %v2620 = vmul.f32 %v2609, %v2556
      %v2621 = vmul.f32 %v2610, %v2556
      %v2622 = vmul.f32 %v2611, %v2556
      %v2623 = vsel %vm2541, %v2612, 0.0
      %2624 = vadd.xlane.f32.xlu0 %v2623
      %v2625 = vpop.xlane.xlu0 %2624
      %v2626 = vsel %vm2541, %v2613, 0.0
      %2627 = vadd.xlane.f32.xlu0 %v2626
      %v2628 = vpop.xlane.xlu0 %2627
      %v2629 = vsel %vm2541, %v2614, 0.0
      %2630 = vadd.xlane.f32.xlu0 %v2629
      %v2631 = vpop.xlane.xlu0 %2630
      %v2632 = vsel %vm2541, %v2615, 0.0
      %2633 = vadd.xlane.f32.xlu0 %v2632
      %v2634 = vpop.xlane.xlu0 %2633
      %v2635 = vsel %vm2541, %v2616, 0.0
      %2636 = vadd.xlane.f32.xlu0 %v2635
      %v2637 = vpop.xlane.xlu0 %2636
      %v2638 = vsel %vm2541, %v2617, 0.0
      %2639 = vadd.xlane.f32.xlu0 %v2638
      %v2640 = vpop.xlane.xlu0 %2639
      %v2641 = vsel %vm2541, %v2618, 0.0
      %2642 = vadd.xlane.f32.xlu0 %v2641
      %v2643 = vpop.xlane.xlu0 %2642
      %v2644 = vsel %vm2541, %v2619, 0.0
      %2645 = vadd.xlane.f32.xlu0 %v2644
      %v2646 = vpop.xlane.xlu0 %2645
      %v2647 = vsel %vm2541, %v2620, 0.0
      %2648 = vadd.xlane.f32.xlu0 %v2647
      %v2649 = vpop.xlane.xlu0 %2648
      %v2650 = vsel %vm2541, %v2621, 0.0
      %2651 = vadd.xlane.f32.xlu0 %v2650
      %v2652 = vpop.xlane.xlu0 %2651
      %v2653 = vsel %vm2541, %v2622, 0.0
      %2654 = vadd.xlane.f32.xlu0 %v2653
      %v2655 = vpop.xlane.xlu0 %2654
      %s2656 = sld [smem:[#allocation4]]
      %v2657 = vstv %s2656
      %v2658 = vmul.f32 %v2625, %v2657
      %v2659 = vadd.f32 %v2658, 0.0
      %s2660 = sld [smem:[#allocation4 + $0x1]]
      %v2661 = vstv %s2660
      %v2662 = vmul.f32 %v2628, %v2661
      %v2663 = vadd.f32 %v2659, %v2662
      %s2664 = sld [smem:[#allocation4 + $0x2]]
      %v2665 = vstv %s2664
      %v2666 = vmul.f32 %v2631, %v2665
      %v2667 = vadd.f32 %v2663, %v2666
      %s2668 = sld [smem:[#allocation4 + $0x3]]
      %v2669 = vstv %s2668
      %v2670 = vmul.f32 %v2634, %v2669
      %v2671 = vadd.f32 %v2667, %v2670
      %s2672 = sld [smem:[#allocation4 + $0x4]]
      %v2673 = vstv %s2672
      %v2674 = vmul.f32 %v2637, %v2673
      %v2675 = vadd.f32 %v2671, %v2674
      %s2676 = sld [smem:[#allocation4 + $0x5]]
      %v2677 = vstv %s2676
      %v2678 = vmul.f32 %v2640, %v2677
      %v2679 = vadd.f32 %v2675, %v2678
      %s2680 = sld [smem:[#allocation4 + $0x6]]
      %v2681 = vstv %s2680
      %v2682 = vmul.f32 %v2643, %v2681
      %v2683 = vadd.f32 %v2679, %v2682
      %s2684 = sld [smem:[#allocation4 + $0x7]]
      %v2685 = vstv %s2684
      %v2686 = vmul.f32 %v2646, %v2685
      %v2687 = vadd.f32 %v2683, %v2686
      %s2688 = sld [smem:[#allocation4 + $0x8]]
      %v2689 = vstv %s2688
      %v2690 = vmul.f32 %v2649, %v2689
      %v2691 = vadd.f32 %v2687, %v2690
      %s2692 = sld [smem:[#allocation4 + $0x9]]
      %v2693 = vstv %s2692
      %v2694 = vmul.f32 %v2652, %v2693
      %v2695 = vadd.f32 %v2691, %v2694
      %s2696 = sld [smem:[#allocation4 + $0xa]]
      %v2697 = vstv %s2696
      %v2698 = vmul.f32 %v2655, %v2697
      %v2699 = vadd.f32 %v2695, %v2698
      %s2700 = sld [smem:[#allocation3]]
      %v2701 = vstv %s2700
      %v2702 = vadd.f32 %v2699, %v2701
      %vm2703 = vcmask 7168
      %2704 = vst.msk [vmem:[%s6] sm:$0xff] %vm2703, %v2702
    $region37: #{neural_ir_score.1} parent=1 // pred_fallthru
      _
    // Predicated region
    $region38: #{neural_ir_score.1} parent=1 // pred_check
      _
    $region39: #{neural_ir_score.1} parent=1 // pred_check_branch
      %2706 = sbr.rel (0) target = $region41
    $region40: #{neural_ir_score.1} parent=1 // pred_region
      _
    $region41: #{neural_ir_score.1} parent=1 // pred_fallthru
      _
    // Predicated region
    $region42: #{neural_ir_score.1} parent=1 // pred_check
      _
    $region43: #{neural_ir_score.1} parent=1 // pred_check_branch
      %2708 = sbr.rel (0) target = $region45
    $region44: #{neural_ir_score.1} parent=1 // pred_region
      _
    $region45: #{neural_ir_score.1} parent=1 // pred_fallthru
      _
    %2709 = vsyncpa [#allocation5], 1

</llo_original>
